<compile_context>
chip_gen: v5e
topology: v5e:2x2
jax: 0.10.0
libtpu: 0.0.40
codegen_flags: <defaults>
</compile_context>

<pallas_src>
import functools

import jax
import jax.numpy as jnp
from jax import lax
from jax.experimental import pallas as pl
from jax.experimental.pallas import tpu as pltpu

EPS = 1e-5
NEG_SLOPE = 0.1


def _conv_act_stats_kernel(win_ref, w_ref, mask_ref, act_ref, sum_ref, sq_ref,
                           *, wp, tile_m):
    """Pass 1: 3x3 conv as 9 shifted bf16 matmuls (f32 accum) + LeakyReLU(0.1) +
    per-tile per-channel sum / sum-of-squares partials for BatchNorm."""
    cout = w_ref.shape[1]
    win = win_ref[0]                                        # (Cin, TILE_M + 2*(Wp+1)) bf16
    acc = jnp.zeros((cout, tile_m), dtype=jnp.float32)
    for ky in range(3):
        for kx in range(3):
            off = ky * wp + kx                              # static in-window offset
            xt = win[:, off:off + tile_m]                   # (Cin, TILE_M)
            acc = acc + jnp.dot(w_ref[ky * 3 + kx], xt,
                                preferred_element_type=jnp.float32)
    act = jnp.where(acc > 0, acc, NEG_SLOPE * acc)          # LeakyReLU(0.1)
    act = act * mask_ref[0]                                 # zero padded / out-of-image cols
    act_ref[0] = act.astype(act_ref.dtype)
    sum_ref[0] = jnp.sum(act, axis=1, keepdims=True)        # (Cout, 1)
    sq_ref[0] = jnp.sum(act * act, axis=1, keepdims=True)   # (Cout, 1)


def _bn_apply_kernel(act_ref, scale_ref, bias_ref, out_ref):
    """Pass 2: streaming y = act * scale + bias (BatchNorm folded into one FMA)."""
    out_ref[0] = (act_ref[0] * scale_ref[...] + bias_ref[...]).astype(out_ref.dtype)


def one_node_forward(x_nchw, conv_w_oihw, gamma, beta, *, tile_m=512):
    """oneNode forward: Conv2d(3x3, pad=1, bias=False) -> LeakyReLU(0.1) ->
    BatchNorm2d (training-mode biased batch statistics)."""
    N, Cin, H, W = x_nchw.shape
    Cout = conv_w_oihw.shape[0]
    Hp, Wp = H + 2, W + 2
    halo = Wp + 1                                  # taps reach +-(Wp+1) flat positions
    Mp = N * Hp * Wp                               # padded flattened lattice size
    count = N * H * W                              # real positions for BN statistics

    # lane-dense tile size (multiple of 128), capped near the problem size
    tile_m = min(int(tile_m), ((Mp + 127) // 128) * 128)
    tile_m = max(128, (tile_m // 128) * 128)
    T = (Mp + tile_m - 1) // tile_m
    Mp_pad = T * tile_m
    win = tile_m + 2 * halo

    # ---------- wrapper-side layout (pure pad / reshape; no 9x im2col blowup) ----------
    x_pad = jnp.pad(x_nchw, ((0, 0), (0, 0), (1, 1), (1, 1)))           # (N,Cin,Hp,Wp)
    x_cf = jnp.transpose(x_pad, (1, 0, 2, 3)).reshape(Cin, Mp)          # channels on sublanes
    x_cf = x_cf.astype(jnp.bfloat16)
    x_flat = jnp.pad(x_cf, ((0, 0), (halo, halo + (Mp_pad - Mp))))      # (Cin, halo+Mp_pad+halo)
    # halo-overlapped windows, one per grid step
    windows = jnp.stack(
        [x_flat[:, t * tile_m: t * tile_m + win] for t in range(T)], axis=0)  # (T,Cin,WIN)

    # per-tap weights: (Cout,Cin,ky,kx) -> (9, Cout, Cin), bf16 for the MXU
    w_taps = jnp.transpose(conv_w_oihw, (2, 3, 0, 1)).reshape(9, Cout, Cin)
    w_taps = w_taps.astype(jnp.bfloat16)

    # validity mask over the padded flattened lattice (1.0 = real output position)
    pos = jnp.arange(Mp_pad, dtype=jnp.int32)
    r = pos % (Hp * Wp)
    hp = r // Wp
    wp_i = r % Wp
    valid = (pos < Mp) & (hp >= 1) & (hp <= H) & (wp_i >= 1) & (wp_i <= W)
    mask = valid.astype(jnp.float32).reshape(T, 1, tile_m)

    cparams = pltpu.CompilerParams(
        dimension_semantics=("parallel",),           # grid steps are fully independent
        vmem_limit_bytes=32 * 1024 * 1024)

    # ---------- pass 1: conv + LeakyReLU + partial BN stats ----------------------------
    kernel1 = functools.partial(_conv_act_stats_kernel, wp=Wp, tile_m=tile_m)
    act, psum, psq = pl.pallas_call(
        kernel1,
        grid=(T,),
        in_specs=[
            pl.BlockSpec((1, Cin, win), lambda t: (t, 0, 0)),
            pl.BlockSpec((9, Cout, Cin), lambda t: (0, 0, 0)),
            pl.BlockSpec((1, 1, tile_m), lambda t: (t, 0, 0)),
        ],
        out_specs=[
            pl.BlockSpec((1, Cout, tile_m), lambda t: (t, 0, 0)),
            pl.BlockSpec((1, Cout, 1), lambda t: (t, 0, 0)),
            pl.BlockSpec((1, Cout, 1), lambda t: (t, 0, 0)),
        ],
        out_shape=[
            jax.ShapeDtypeStruct((T, Cout, tile_m), jnp.float32),
            jax.ShapeDtypeStruct((T, Cout, 1), jnp.float32),
            jax.ShapeDtypeStruct((T, Cout, 1), jnp.float32),
        ],
        compiler_params=cparams,
    )(windows, w_taps, mask)

    # ---------- finalize BN stats (tiny (Cout,) math, f32) -----------------------------
    # NOTE: E[x^2] - E[x]^2 in f32 is safe here (post-LeakyReLU |mean| ~ std).
    tot = jnp.sum(psum, axis=0)                      # (Cout, 1)
    tot_sq = jnp.sum(psq, axis=0)
    mean = tot / count
    var = jnp.maximum(tot_sq / count - mean * mean, 0.0)    # biased variance (PyTorch BN)
    inv = lax.rsqrt(var + EPS)
    scale = gamma.reshape(Cout, 1).astype(jnp.float32) * inv
    bias = beta.reshape(Cout, 1).astype(jnp.float32) - mean * scale

    # ---------- pass 2: streaming normalize (y = act*scale + bias) ---------------------
    out_tiles = pl.pallas_call(
        _bn_apply_kernel,
        grid=(T,),
        in_specs=[
            pl.BlockSpec((1, Cout, tile_m), lambda t: (t, 0, 0)),
            pl.BlockSpec((Cout, 1), lambda t: (0, 0)),
            pl.BlockSpec((Cout, 1), lambda t: (0, 0)),
        ],
        out_specs=pl.BlockSpec((1, Cout, tile_m), lambda t: (t, 0, 0)),
        out_shape=jax.ShapeDtypeStruct((T, Cout, tile_m), jnp.float32),
        compiler_params=cparams,
    )(act, scale, bias)

    # ---------- back to NCHW ------------------------------------------------------------
    out_flat = jnp.transpose(out_tiles, (1, 0, 2)).reshape(Cout, Mp_pad)[:, :Mp]
    out = out_flat.reshape(Cout, N, Hp, Wp)[:, :, 1:H + 1, 1:W + 1]
    # TODO(synk): BatchNorm running-mean/var (momentum) buffer updates are training-state
    # side effects with no functional output; not emitted here.
    return jnp.transpose(out, (1, 0, 2, 3))


def one_node_reference(x_nchw, conv_w_oihw, gamma, beta):
    """Independent plain-JAX reference (conv via lax.conv)."""
    out = lax.conv_general_dilated(
        x_nchw, conv_w_oihw, window_strides=(1, 1), padding="SAME",
        dimension_numbers=("NCHW", "OIHW", "NCHW"))
    out = jnp.where(out > 0, out, NEG_SLOPE * out)
    mean = jnp.mean(out, axis=(0, 2, 3), keepdims=True)
    var = jnp.mean((out - mean) ** 2, axis=(0, 2, 3), keepdims=True)
    out = (out - mean) * lax.rsqrt(var + EPS)
    return out * gamma.reshape(1, -1, 1, 1) + beta.reshape(1, -1, 1, 1)


if __name__ == "__main__":
    key = jax.random.PRNGKey(0)
    k_x, k_w = jax.random.split(key)

    N, Cin, H, W = 2, 4, 16, 16
    Cout = 8

    x = jax.random.normal(k_x, (N, Cin, H, W), dtype=jnp.float32)
    # Deterministic synthetic conv weight (fan-in scaled); non-trivial BN affine params.
    conv_w = jax.random.normal(k_w, (Cout, Cin, 3, 3), dtype=jnp.float32) * (1.0 / (Cin * 9) ** 0.5)
    gamma = jnp.linspace(0.5, 1.5, Cout, dtype=jnp.float32)
    beta = jnp.linspace(-0.2, 0.2, Cout, dtype=jnp.float32)

    fwd = jax.jit(one_node_forward)
    out = jax.block_until_ready(fwd(x, conv_w, gamma, beta))

    # Reference evaluated on the same bf16-quantized operands the kernel feeds the MXU.
    xq = x.astype(jnp.bfloat16).astype(jnp.float32)
    wq = conv_w.astype(jnp.bfloat16).astype(jnp.float32)
    ref = jax.block_until_ready(one_node_reference(xq, wq, gamma, beta))

    assert out.shape == (N, Cout, H, W)
    err = float(jnp.max(jnp.abs(out - ref)))
    assert err < 2e-3, f"mismatch vs reference: {err}"
    print("KERNEL_OK")
</pallas_src>

<mosaic_0001>
module attributes {stable_mosaic.version = 11 : i64} {
  func.func @_conv_act_stats_kernel(%arg0: i32, %arg1: memref<1x4x550xbf16, #tpu.memory_space<vmem>>, %arg2: memref<9x8x4xbf16, #tpu.memory_space<vmem>>, %arg3: memref<1x1x512xf32, #tpu.memory_space<vmem>>, %arg4: memref<1x8x512xf32, #tpu.memory_space<vmem>>, %arg5: memref<1x8x1xf32, #tpu.memory_space<vmem>>, %arg6: memref<1x8x1xf32, #tpu.memory_space<vmem>>) attributes {dimension_semantics = [#tpu.dimension_semantics<parallel>], iteration_bounds = array<i64: 2>, scalar_prefetch = 0 : i64, scratch_operands = 0 : i64, tpu.core_type = #tpu.core_type<tc>, window_params = [{transform_indices = @transform_0, window_bounds = array<i64: 1, 4, 550>}, {pipeline_mode = #tpu.pipeline_mode<synchronous>, transform_indices = @transform_1, window_bounds = array<i64: 9, 8, 4>}, {transform_indices = @transform_2, window_bounds = array<i64: 1, 1, 512>}, {transform_indices = @transform_3, window_bounds = array<i64: 1, 8, 512>}, {transform_indices = @transform_4, window_bounds = array<i64: 1, 8, 1>}, {transform_indices = @transform_5, window_bounds = array<i64: 1, 8, 1>}]} {
    %c0 = arith.constant 0 : index
    %c0_0 = arith.constant 0 : index
    %c0_1 = arith.constant 0 : index
    %0 = vector.load %arg1[%c0, %c0_0, %c0_1] : memref<1x4x550xbf16, #tpu.memory_space<vmem>>, vector<1x4x550xbf16>
    %1 = vector.shape_cast %0 : vector<1x4x550xbf16> to vector<4x550xbf16>
    %cst = arith.constant 0.000000e+00 : f32
    %2 = vector.broadcast %cst : f32 to vector<8x512xf32>
    %3 = vector.extract_strided_slice %1 {offsets = [0, 0], sizes = [4, 512], strides = [1, 1]} : vector<4x550xbf16> to vector<4x512xbf16>
    %c0_2 = arith.constant 0 : index
    %c0_3 = arith.constant 0 : index
    %c0_4 = arith.constant 0 : index
    %4 = vector.load %arg2[%c0_2, %c0_3, %c0_4] : memref<9x8x4xbf16, #tpu.memory_space<vmem>>, vector<1x8x4xbf16>
    %5 = vector.shape_cast %4 : vector<1x8x4xbf16> to vector<8x4xbf16>
    %cst_5 = arith.constant dense<0.000000e+00> : vector<8x512xf32>
    %6 = tpu.matmul %5, %3, %cst_5 {dimension_numbers = #tpu.dot_dimension_numbers<[1], [0], [0], [1], [0, 0, 1, 1], [], []>} : vector<8x4xbf16>, vector<4x512xbf16>, vector<8x512xf32> -> vector<8x512xf32>
    %7 = arith.addf %2, %6 : vector<8x512xf32>
    %8 = vector.extract_strided_slice %1 {offsets = [0, 1], sizes = [4, 512], strides = [1, 1]} : vector<4x550xbf16> to vector<4x512xbf16>
    %c1 = arith.constant 1 : index
    %c0_6 = arith.constant 0 : index
    %c0_7 = arith.constant 0 : index
    %9 = vector.load %arg2[%c1, %c0_6, %c0_7] : memref<9x8x4xbf16, #tpu.memory_space<vmem>>, vector<1x8x4xbf16>
    %10 = vector.shape_cast %9 : vector<1x8x4xbf16> to vector<8x4xbf16>
    %cst_8 = arith.constant dense<0.000000e+00> : vector<8x512xf32>
    %11 = tpu.matmul %10, %8, %cst_8 {dimension_numbers = #tpu.dot_dimension_numbers<[1], [0], [0], [1], [0, 0, 1, 1], [], []>} : vector<8x4xbf16>, vector<4x512xbf16>, vector<8x512xf32> -> vector<8x512xf32>
    %12 = arith.addf %7, %11 : vector<8x512xf32>
    %13 = vector.extract_strided_slice %1 {offsets = [0, 2], sizes = [4, 512], strides = [1, 1]} : vector<4x550xbf16> to vector<4x512xbf16>
    %c2 = arith.constant 2 : index
    %c0_9 = arith.constant 0 : index
    %c0_10 = arith.constant 0 : index
    %14 = vector.load %arg2[%c2, %c0_9, %c0_10] : memref<9x8x4xbf16, #tpu.memory_space<vmem>>, vector<1x8x4xbf16>
    %15 = vector.shape_cast %14 : vector<1x8x4xbf16> to vector<8x4xbf16>
    %cst_11 = arith.constant dense<0.000000e+00> : vector<8x512xf32>
    %16 = tpu.matmul %15, %13, %cst_11 {dimension_numbers = #tpu.dot_dimension_numbers<[1], [0], [0], [1], [0, 0, 1, 1], [], []>} : vector<8x4xbf16>, vector<4x512xbf16>, vector<8x512xf32> -> vector<8x512xf32>
    %17 = arith.addf %12, %16 : vector<8x512xf32>
    %18 = vector.extract_strided_slice %1 {offsets = [0, 18], sizes = [4, 512], strides = [1, 1]} : vector<4x550xbf16> to vector<4x512xbf16>
    %c3 = arith.constant 3 : index
    %c0_12 = arith.constant 0 : index
    %c0_13 = arith.constant 0 : index
    %19 = vector.load %arg2[%c3, %c0_12, %c0_13] : memref<9x8x4xbf16, #tpu.memory_space<vmem>>, vector<1x8x4xbf16>
    %20 = vector.shape_cast %19 : vector<1x8x4xbf16> to vector<8x4xbf16>
    %cst_14 = arith.constant dense<0.000000e+00> : vector<8x512xf32>
    %21 = tpu.matmul %20, %18, %cst_14 {dimension_numbers = #tpu.dot_dimension_numbers<[1], [0], [0], [1], [0, 0, 1, 1], [], []>} : vector<8x4xbf16>, vector<4x512xbf16>, vector<8x512xf32> -> vector<8x512xf32>
    %22 = arith.addf %17, %21 : vector<8x512xf32>
    %23 = vector.extract_strided_slice %1 {offsets = [0, 19], sizes = [4, 512], strides = [1, 1]} : vector<4x550xbf16> to vector<4x512xbf16>
    %c4 = arith.constant 4 : index
    %c0_15 = arith.constant 0 : index
    %c0_16 = arith.constant 0 : index
    %24 = vector.load %arg2[%c4, %c0_15, %c0_16] : memref<9x8x4xbf16, #tpu.memory_space<vmem>>, vector<1x8x4xbf16>
    %25 = vector.shape_cast %24 : vector<1x8x4xbf16> to vector<8x4xbf16>
    %cst_17 = arith.constant dense<0.000000e+00> : vector<8x512xf32>
    %26 = tpu.matmul %25, %23, %cst_17 {dimension_numbers = #tpu.dot_dimension_numbers<[1], [0], [0], [1], [0, 0, 1, 1], [], []>} : vector<8x4xbf16>, vector<4x512xbf16>, vector<8x512xf32> -> vector<8x512xf32>
    %27 = arith.addf %22, %26 : vector<8x512xf32>
    %28 = vector.extract_strided_slice %1 {offsets = [0, 20], sizes = [4, 512], strides = [1, 1]} : vector<4x550xbf16> to vector<4x512xbf16>
    %c5 = arith.constant 5 : index
    %c0_18 = arith.constant 0 : index
    %c0_19 = arith.constant 0 : index
    %29 = vector.load %arg2[%c5, %c0_18, %c0_19] : memref<9x8x4xbf16, #tpu.memory_space<vmem>>, vector<1x8x4xbf16>
    %30 = vector.shape_cast %29 : vector<1x8x4xbf16> to vector<8x4xbf16>
    %cst_20 = arith.constant dense<0.000000e+00> : vector<8x512xf32>
    %31 = tpu.matmul %30, %28, %cst_20 {dimension_numbers = #tpu.dot_dimension_numbers<[1], [0], [0], [1], [0, 0, 1, 1], [], []>} : vector<8x4xbf16>, vector<4x512xbf16>, vector<8x512xf32> -> vector<8x512xf32>
    %32 = arith.addf %27, %31 : vector<8x512xf32>
    %33 = vector.extract_strided_slice %1 {offsets = [0, 36], sizes = [4, 512], strides = [1, 1]} : vector<4x550xbf16> to vector<4x512xbf16>
    %c6 = arith.constant 6 : index
    %c0_21 = arith.constant 0 : index
    %c0_22 = arith.constant 0 : index
    %34 = vector.load %arg2[%c6, %c0_21, %c0_22] : memref<9x8x4xbf16, #tpu.memory_space<vmem>>, vector<1x8x4xbf16>
    %35 = vector.shape_cast %34 : vector<1x8x4xbf16> to vector<8x4xbf16>
    %cst_23 = arith.constant dense<0.000000e+00> : vector<8x512xf32>
    %36 = tpu.matmul %35, %33, %cst_23 {dimension_numbers = #tpu.dot_dimension_numbers<[1], [0], [0], [1], [0, 0, 1, 1], [], []>} : vector<8x4xbf16>, vector<4x512xbf16>, vector<8x512xf32> -> vector<8x512xf32>
    %37 = arith.addf %32, %36 : vector<8x512xf32>
    %38 = vector.extract_strided_slice %1 {offsets = [0, 37], sizes = [4, 512], strides = [1, 1]} : vector<4x550xbf16> to vector<4x512xbf16>
    %c7 = arith.constant 7 : index
    %c0_24 = arith.constant 0 : index
    %c0_25 = arith.constant 0 : index
    %39 = vector.load %arg2[%c7, %c0_24, %c0_25] : memref<9x8x4xbf16, #tpu.memory_space<vmem>>, vector<1x8x4xbf16>
    %40 = vector.shape_cast %39 : vector<1x8x4xbf16> to vector<8x4xbf16>
    %cst_26 = arith.constant dense<0.000000e+00> : vector<8x512xf32>
    %41 = tpu.matmul %40, %38, %cst_26 {dimension_numbers = #tpu.dot_dimension_numbers<[1], [0], [0], [1], [0, 0, 1, 1], [], []>} : vector<8x4xbf16>, vector<4x512xbf16>, vector<8x512xf32> -> vector<8x512xf32>
    %42 = arith.addf %37, %41 : vector<8x512xf32>
    %43 = vector.extract_strided_slice %1 {offsets = [0, 38], sizes = [4, 512], strides = [1, 1]} : vector<4x550xbf16> to vector<4x512xbf16>
    %c8 = arith.constant 8 : index
    %c0_27 = arith.constant 0 : index
    %c0_28 = arith.constant 0 : index
    %44 = vector.load %arg2[%c8, %c0_27, %c0_28] : memref<9x8x4xbf16, #tpu.memory_space<vmem>>, vector<1x8x4xbf16>
    %45 = vector.shape_cast %44 : vector<1x8x4xbf16> to vector<8x4xbf16>
    %cst_29 = arith.constant dense<0.000000e+00> : vector<8x512xf32>
    %46 = tpu.matmul %45, %43, %cst_29 {dimension_numbers = #tpu.dot_dimension_numbers<[1], [0], [0], [1], [0, 0, 1, 1], [], []>} : vector<8x4xbf16>, vector<4x512xbf16>, vector<8x512xf32> -> vector<8x512xf32>
    %47 = arith.addf %42, %46 : vector<8x512xf32>
    %cst_30 = arith.constant 0.000000e+00 : f32
    %48 = vector.broadcast %cst_30 : f32 to vector<8x512xf32>
    %49 = arith.cmpf ogt, %47, %48 : vector<8x512xf32>
    %cst_31 = arith.constant 1.000000e-01 : f32
    %50 = vector.broadcast %cst_31 : f32 to vector<8x512xf32>
    %51 = arith.mulf %50, %47 : vector<8x512xf32>
    %52 = arith.select %49, %47, %51 : vector<8x512xi1>, vector<8x512xf32>
    %c0_32 = arith.constant 0 : index
    %c0_33 = arith.constant 0 : index
    %c0_34 = arith.constant 0 : index
    %53 = vector.load %arg3[%c0_32, %c0_33, %c0_34] : memref<1x1x512xf32, #tpu.memory_space<vmem>>, vector<1x1x512xf32>
    %54 = vector.shape_cast %53 : vector<1x1x512xf32> to vector<1x512xf32>
    %55 = vector.broadcast %54 : vector<1x512xf32> to vector<8x512xf32>
    %56 = arith.mulf %52, %55 : vector<8x512xf32>
    %c0_35 = arith.constant 0 : index
    %c0_36 = arith.constant 0 : index
    %c0_37 = arith.constant 0 : index
    %57 = vector.load %arg4[%c0_35, %c0_36, %c0_37] : memref<1x8x512xf32, #tpu.memory_space<vmem>>, vector<1x8x512xf32>
    %58 = vector.shape_cast %57 : vector<1x8x512xf32> to vector<8x512xf32>
    %59 = vector.shape_cast %56 : vector<8x512xf32> to vector<1x8x512xf32>
    tpu.vector_store %arg4[%c0_35, %c0_36, %c0_37], %59 {strides = array<i32>} : memref<1x8x512xf32, #tpu.memory_space<vmem>>, vector<1x8x512xf32>,
    %cst_38 = arith.constant dense<0.000000e+00> : vector<8xf32>
    %60 = vector.multi_reduction <add>, %56, %cst_38 [1] : vector<8x512xf32> to vector<8xf32>
    %61 = vector.shape_cast %60 : vector<8xf32> to vector<8x1xf32>
    %c0_39 = arith.constant 0 : index
    %c0_40 = arith.constant 0 : index
    %c0_41 = arith.constant 0 : index
    %62 = vector.load %arg5[%c0_39, %c0_40, %c0_41] : memref<1x8x1xf32, #tpu.memory_space<vmem>>, vector<1x8x1xf32>
    %63 = vector.shape_cast %62 : vector<1x8x1xf32> to vector<8x1xf32>
    %64 = vector.shape_cast %61 : vector<8x1xf32> to vector<1x8x1xf32>
    tpu.vector_store %arg5[%c0_39, %c0_40, %c0_41], %64 {strides = array<i32>} : memref<1x8x1xf32, #tpu.memory_space<vmem>>, vector<1x8x1xf32>,
    %65 = arith.mulf %56, %56 : vector<8x512xf32>
    %cst_42 = arith.constant dense<0.000000e+00> : vector<8xf32>
    %66 = vector.multi_reduction <add>, %65, %cst_42 [1] : vector<8x512xf32> to vector<8xf32>
    %67 = vector.shape_cast %66 : vector<8xf32> to vector<8x1xf32>
    %c0_43 = arith.constant 0 : index
    %c0_44 = arith.constant 0 : index
    %c0_45 = arith.constant 0 : index
    %68 = vector.load %arg6[%c0_43, %c0_44, %c0_45] : memref<1x8x1xf32, #tpu.memory_space<vmem>>, vector<1x8x1xf32>
    %69 = vector.shape_cast %68 : vector<1x8x1xf32> to vector<8x1xf32>
    %70 = vector.shape_cast %67 : vector<8x1xf32> to vector<1x8x1xf32>
    tpu.vector_store %arg6[%c0_43, %c0_44, %c0_45], %70 {strides = array<i32>} : memref<1x8x1xf32, #tpu.memory_space<vmem>>, vector<1x8x1xf32>,
    return
  }
  func.func @transform_0(%arg0: i32) -> (i32, i32, i32) {
    %c0_i32 = arith.constant 0 : i32
    %c0_i32_0 = arith.constant 0 : i32
    %c0_i32_1 = arith.constant 0 : i32
    return %arg0, %c0_i32, %c0_i32_0 : i32, i32, i32
  }
  func.func @transform_1(%arg0: i32) -> (i32, i32, i32) {
    %c0_i32 = arith.constant 0 : i32
    %c0_i32_0 = arith.constant 0 : i32
    %c0_i32_1 = arith.constant 0 : i32
    %c0_i32_2 = arith.constant 0 : i32
    return %c0_i32, %c0_i32_0, %c0_i32_1 : i32, i32, i32
  }
  func.func @transform_2(%arg0: i32) -> (i32, i32, i32) {
    %c0_i32 = arith.constant 0 : i32
    %c0_i32_0 = arith.constant 0 : i32
    %c0_i32_1 = arith.constant 0 : i32
    return %arg0, %c0_i32, %c0_i32_0 : i32, i32, i32
  }
  func.func @transform_3(%arg0: i32) -> (i32, i32, i32) {
    %c0_i32 = arith.constant 0 : i32
    %c0_i32_0 = arith.constant 0 : i32
    %c0_i32_1 = arith.constant 0 : i32
    return %arg0, %c0_i32, %c0_i32_0 : i32, i32, i32
  }
  func.func @transform_4(%arg0: i32) -> (i32, i32, i32) {
    %c0_i32 = arith.constant 0 : i32
    %c0_i32_0 = arith.constant 0 : i32
    %c0_i32_1 = arith.constant 0 : i32
    return %arg0, %c0_i32, %c0_i32_0 : i32, i32, i32
  }
  func.func @transform_5(%arg0: i32) -> (i32, i32, i32) {
    %c0_i32 = arith.constant 0 : i32
    %c0_i32_0 = arith.constant 0 : i32
    %c0_i32_1 = arith.constant 0 : i32
    return %arg0, %c0_i32, %c0_i32_0 : i32, i32, i32
  }
}

module attributes {stable_mosaic.version = 11 : i64} {
  func.func @_bn_apply_kernel(%arg0: i32, %arg1: memref<1x8x512xf32, #tpu.memory_space<vmem>>, %arg2: memref<8x1xf32, #tpu.memory_space<vmem>>, %arg3: memref<8x1xf32, #tpu.memory_space<vmem>>, %arg4: memref<1x8x512xf32, #tpu.memory_space<vmem>>) attributes {dimension_semantics = [#tpu.dimension_semantics<parallel>], iteration_bounds = array<i64: 2>, scalar_prefetch = 0 : i64, scratch_operands = 0 : i64, tpu.core_type = #tpu.core_type<tc>, window_params = [{transform_indices = @transform_0, window_bounds = array<i64: 1, 8, 512>}, {pipeline_mode = #tpu.pipeline_mode<synchronous>, transform_indices = @transform_1, window_bounds = array<i64: 8, 1>}, {pipeline_mode = #tpu.pipeline_mode<synchronous>, transform_indices = @transform_2, window_bounds = array<i64: 8, 1>}, {transform_indices = @transform_3, window_bounds = array<i64: 1, 8, 512>}]} {
    %c0 = arith.constant 0 : index
    %c0_0 = arith.constant 0 : index
    %c0_1 = arith.constant 0 : index
    %0 = vector.load %arg1[%c0, %c0_0, %c0_1] : memref<1x8x512xf32, #tpu.memory_space<vmem>>, vector<1x8x512xf32>
    %1 = vector.shape_cast %0 : vector<1x8x512xf32> to vector<8x512xf32>
    %c0_2 = arith.constant 0 : index
    %c0_3 = arith.constant 0 : index
    %2 = vector.load %arg2[%c0_2, %c0_3] : memref<8x1xf32, #tpu.memory_space<vmem>>, vector<8x1xf32>
    %3 = vector.broadcast %2 : vector<8x1xf32> to vector<8x512xf32>
    %4 = arith.mulf %1, %3 : vector<8x512xf32>
    %c0_4 = arith.constant 0 : index
    %c0_5 = arith.constant 0 : index
    %5 = vector.load %arg3[%c0_4, %c0_5] : memref<8x1xf32, #tpu.memory_space<vmem>>, vector<8x1xf32>
    %6 = vector.broadcast %5 : vector<8x1xf32> to vector<8x512xf32>
    %7 = arith.addf %4, %6 : vector<8x512xf32>
    %c0_6 = arith.constant 0 : index
    %c0_7 = arith.constant 0 : index
    %c0_8 = arith.constant 0 : index
    %8 = vector.load %arg4[%c0_6, %c0_7, %c0_8] : memref<1x8x512xf32, #tpu.memory_space<vmem>>, vector<1x8x512xf32>
    %9 = vector.shape_cast %8 : vector<1x8x512xf32> to vector<8x512xf32>
    %10 = vector.shape_cast %7 : vector<8x512xf32> to vector<1x8x512xf32>
    tpu.vector_store %arg4[%c0_6, %c0_7, %c0_8], %10 {strides = array<i32>} : memref<1x8x512xf32, #tpu.memory_space<vmem>>, vector<1x8x512xf32>,
    return
  }
  func.func @transform_0(%arg0: i32) -> (i32, i32, i32) {
    %c0_i32 = arith.constant 0 : i32
    %c0_i32_0 = arith.constant 0 : i32
    %c0_i32_1 = arith.constant 0 : i32
    return %arg0, %c0_i32, %c0_i32_0 : i32, i32, i32
  }
  func.func @transform_1(%arg0: i32) -> (i32, i32) {
    %c0_i32 = arith.constant 0 : i32
    %c0_i32_0 = arith.constant 0 : i32
    %c0_i32_1 = arith.constant 0 : i32
    return %c0_i32, %c0_i32_0 : i32, i32
  }
  func.func @transform_2(%arg0: i32) -> (i32, i32) {
    %c0_i32 = arith.constant 0 : i32
    %c0_i32_0 = arith.constant 0 : i32
    %c0_i32_1 = arith.constant 0 : i32
    return %c0_i32, %c0_i32_0 : i32, i32
  }
  func.func @transform_3(%arg0: i32) -> (i32, i32, i32) {
    %c0_i32 = arith.constant 0 : i32
    %c0_i32_0 = arith.constant 0 : i32
    %c0_i32_1 = arith.constant 0 : i32
    return %arg0, %c0_i32, %c0_i32_0 : i32, i32, i32
  }
}

</mosaic_0001>

<llo_original>
// kernel: one_node_forward.3
$region0: #{one_node_forward.3}
  #allocation0 [shape = 'u32[]', space=smem, size = 0x4, offset = 0x4, fixed_abs, tag = 'smem constant byte address 0x4 - core index']
  #allocation1 [shape = 'u32[72,128]{1,0:T(1,128)}', space=vmem, size = 0x9000, scoped, tag = 'internal scratch']
  %s0 = inlined_call_operand.vmem [shape: f32[2,8,512], index: 0, kind: input, shape index: {}]
  %s1 = inlined_call_operand.vmem [shape: f32[8,1], index: 1, kind: input, shape index: {}]
  %s2 = inlined_call_operand.vmem [shape: f32[8,1], index: 2, kind: input, shape index: {}]
  %s3 = inlined_call_operand.vmem [shape: f32[2,8,512], index: 3, kind: output, shape index: {}]
  %s4 = sld [smem:[#allocation0]]
  $region45: #{one_node_forward.3} parent=0
    _
  %s6 = ssub.s32 1, %s4
  %s7 = scalar_select 0, %s6, %s4
  loop: start=0, step=1, limit=4
  $region2: #{one_node_forward.3} parent=0 // loop_pre_header
    _
  $region3: #{one_node_forward.3} parent=0 // loop_header
    %s9 = sphi 0, %s13
    %p10 = scmp.ge.s32.totalorder %s9, 4
    %s19 = sphi 0, %s21
    %s22 = sphi 0, %s19
    %s23 = sphi 0, %s22
    %s39 = sphi 0, %s23
    %s43 = sphi 0, %s43
    %s45 = sphi 0, %s43
    %s46 = sphi 0, %s45
    %s60 = sphi 0, %s46
    %s64 = sphi 0, %s64
    %s66 = sphi 0, %s64
    %s67 = sphi 0, %s66
    %s81 = sphi 0, %s67
    %s87 = sphi 0, %s89
    %s90 = sphi 0, %s87
    %s91 = sphi 0, %s90
    %s107 = sphi 0, %s91
  $region4: #{one_node_forward.3} parent=0 // loop_header_branch
    %12 = sbr.rel (%p10) target = $region8
  $region5: #{one_node_forward.3} parent=0 // loop_body
    %s14 = ssub.s32 %s9, 1
    %s15 = ssub.s32 %s9, 2
    %s16 = sadd.s32 %s9, 1
    %s17 = ssub.s32 %s9, %s16
    %p18 = scmp.eq.s32.totalorder %s17, 0
    %s20 = sadd.s32 %s19, 1
    %s21 = scalar_select %p18, %s19, %s20
    %p24 = pneg %p18
    %p25 = scmp.eq.s32.totalorder %s9, 1
    %p26 = por %p24, %p25
    %p27 = scmp.ne.s32.totalorder %s19, %s22
    %p28 = scmp.eq.s32.totalorder %s9, 0
    %p29 = por %p27, %p28
    %p30 = scmp.ne.s32.totalorder %s19, %s22
    %p31 = scmp.eq.s32.totalorder %s14, 1
    %p32 = por %p30, %p31
    %p33 = scmp.ne.s32.totalorder %s22, %s23
    %p34 = scmp.eq.s32.totalorder %s14, 0
    %p35 = por %p33, %p34
    %p36 = scmp.ne.s32.totalorder %s22, %s23
    %p37 = scmp.eq.s32.totalorder %s15, 1
    %p38 = por %p36, %p37
    %p40 = scmp.ne.s32.totalorder %s23, %s39
    %p41 = scmp.eq.s32.totalorder %s15, 0
    %p42 = por %p40, %p41
    %s44 = sadd.s32 %s43, 1
    %p47 = scmp.eq.s32.totalorder %s9, 1
    %p48 = scmp.ne.s32.totalorder %s43, %s45
    %p49 = scmp.eq.s32.totalorder %s9, 0
    %p50 = por %p48, %p49
    %p51 = scmp.ne.s32.totalorder %s43, %s45
    %p52 = scmp.eq.s32.totalorder %s14, 1
    %p53 = por %p51, %p52
    %p54 = scmp.ne.s32.totalorder %s45, %s46
    %p55 = scmp.eq.s32.totalorder %s14, 0
    %p56 = por %p54, %p55
    %p57 = scmp.ne.s32.totalorder %s45, %s46
    %p58 = scmp.eq.s32.totalorder %s15, 1
    %p59 = por %p57, %p58
    %p61 = scmp.ne.s32.totalorder %s46, %s60
    %p62 = scmp.eq.s32.totalorder %s15, 0
    %p63 = por %p61, %p62
    %s65 = sadd.s32 %s64, 1
    %p68 = scmp.eq.s32.totalorder %s9, 1
    %p69 = scmp.ne.s32.totalorder %s64, %s66
    %p70 = scmp.eq.s32.totalorder %s9, 0
    %p71 = por %p69, %p70
    %p72 = scmp.ne.s32.totalorder %s64, %s66
    %p73 = scmp.eq.s32.totalorder %s14, 1
    %p74 = por %p72, %p73
    %p75 = scmp.ne.s32.totalorder %s66, %s67
    %p76 = scmp.eq.s32.totalorder %s14, 0
    %p77 = por %p75, %p76
    %p78 = scmp.ne.s32.totalorder %s66, %s67
    %p79 = scmp.eq.s32.totalorder %s15, 1
    %p80 = por %p78, %p79
    %p82 = scmp.ne.s32.totalorder %s67, %s81
    %p83 = scmp.eq.s32.totalorder %s15, 0
    %p84 = por %p82, %p83
    %s85 = ssub.s32 %s9, %s16
    %p86 = scmp.eq.s32.totalorder %s85, 0
    %s88 = sadd.s32 %s87, 1
    %s89 = scalar_select %p86, %s87, %s88
    %p92 = pneg %p86
    %p93 = scmp.eq.s32.totalorder %s9, 1
    %p94 = por %p92, %p93
    %p95 = scmp.ne.s32.totalorder %s87, %s90
    %p96 = scmp.eq.s32.totalorder %s9, 0
    %p97 = por %p95, %p96
    %p98 = scmp.ne.s32.totalorder %s87, %s90
    %p99 = scmp.eq.s32.totalorder %s14, 1
    %p100 = por %p98, %p99
    %p101 = scmp.ne.s32.totalorder %s90, %s91
    %p102 = scmp.eq.s32.totalorder %s14, 0
    %p103 = por %p101, %p102
    %p104 = scmp.ne.s32.totalorder %s90, %s91
    %p105 = scmp.eq.s32.totalorder %s15, 1
    %p106 = por %p104, %p105
    %p108 = scmp.ne.s32.totalorder %s91, %s107
    %p109 = scmp.eq.s32.totalorder %s15, 0
    %p110 = por %p108, %p109
    %p111 = scmp.le.s32.totalorder 1, %s9
    %p112 = scmp.lt.s32.totalorder %s9, 3
    %p113 = pnand %p111, %p112
    %p114 = pneg %p113
    // Predicated region
    $region9: #{one_node_forward.3} parent=5 // pred_check
      _
    $region10: #{one_node_forward.3} parent=5 // pred_check_branch
      %116 = sbr.rel (%p113) target = $region12
    $region11: #{one_node_forward.3} parent=5 // pred_region
      %s117 = ssub.s32 %s9, 1
      // Predicated region
      $region13: #{one_node_forward.3} parent=11 // pred_check
        %p118 = pneg %p56
      $region14: #{one_node_forward.3} parent=11 // pred_check_branch
        %120 = sbr.rel (%p118) target = $region16
      $region15: #{one_node_forward.3} parent=11 // pred_region
        _
      $region16: #{one_node_forward.3} parent=11 // pred_fallthru
        _
      // Predicated region
      $region17: #{one_node_forward.3} parent=11 // pred_check
        %p121 = pneg %p77
      $region18: #{one_node_forward.3} parent=11 // pred_check_branch
        %123 = sbr.rel (%p121) target = $region20
      $region19: #{one_node_forward.3} parent=11 // pred_region
        _
      $region20: #{one_node_forward.3} parent=11 // pred_fallthru
        _
    $region12: #{one_node_forward.3} parent=5 // pred_fallthru
      _
    %p124 = scmp.lt.s32.totalorder %s9, 2
    // Predicated region
    $region21: #{one_node_forward.3} parent=5 // pred_check
      %p125 = pneg %p124
    $region22: #{one_node_forward.3} parent=5 // pred_check_branch
      %127 = sbr.rel (%p125) target = $region24
    $region23: #{one_node_forward.3} parent=5 // pred_region
      // Predicated region
      $region25: #{one_node_forward.3} parent=23 // pred_check
        %p128 = pneg %p29
      $region26: #{one_node_forward.3} parent=23 // pred_check_branch
        %130 = sbr.rel (%p128) target = $region28
      $region27: #{one_node_forward.3} parent=23 // pred_region
        %p131 = scmp.lt.s32.totalorder %s9, 1
        %s132 = scalar_select %p131, %s9, 1
        %s133 = smul.addr %s132, 4
        %s134 = smul.addr %s133, 8
        %s135 = scalar_lea.vmem %s0, %s134
      $region28: #{one_node_forward.3} parent=23 // pred_fallthru
        _
    $region24: #{one_node_forward.3} parent=5 // pred_fallthru
      _
    %p136 = scmp.le.s32.totalorder 1, %s9
    %p137 = scmp.lt.s32.totalorder %s9, 3
    %p138 = pnand %p136, %p137
    %p139 = pneg %p138
    // Predicated region
    $region29: #{one_node_forward.3} parent=5 // pred_check
      _
    $region30: #{one_node_forward.3} parent=5 // pred_check_branch
      %141 = sbr.rel (%p138) target = $region32
    $region31: #{one_node_forward.3} parent=5 // pred_region
      %s142 = ssub.s32 %s9, 1
      %p143 = scmp.lt.s32.totalorder %s14, 1
      %s144 = scalar_select %p143, %s14, 1
      %s145 = smul.addr %s144, 4
      %s146 = smul.addr %s145, 8
      %s147 = scalar_lea.vmem %s0, %s146
      %p148 = pneg %p35
      %p149 = pneg %p32
      %p150 = pneg %p56
      %p151 = pneg %p53
      %p152 = pneg %p77
      %p153 = pneg %p74
      %p154 = pneg %p103
      %p155 = pneg %p100
      %p156 = scmp.lt.s32.totalorder %s14, 1
      %s157 = scalar_select %p156, %s14, 1
      %s158 = smul.addr %s157, 4
      %s159 = smul.addr %s158, 8
      %s160 = scalar_lea.vmem %s3, %s159
      %p161 = scmp.lt.s32.totalorder %s14, 1
      %s162 = scalar_select %p161, %s14, 1
      %s163 = smul.addr %s162, 4
      %s164 = smul.addr %s163, 8
      %s165 = scalar_lea.vmem %s0, %s164
      %p166 = scmp.lt.s32.totalorder %s14, 1
      %s167 = scalar_select %p166, %s14, 1
      %s168 = smul.addr %s167, 4
      %s169 = smul.addr %s168, 8
      %s170 = scalar_lea.vmem %s3, %s169
      %v171 = vld [vmem:[%s165] sm:$0xff]
      %v172 = vld [vmem:[%s165 + $0x8] sm:$0xff]
      %v173 = vld [vmem:[%s165 + $0x10] sm:$0xff]
      %v174 = vld [vmem:[%s165 + $0x18] sm:$0xff]
      %v175 = vld [vmem:[%s1] sm:$0xff]
      %177 = vset.pattern.permute.xlu0 0
      %178 = vperm.xlu0 %177, %v175
      %v179 = vpop.permute.xlu0 %178
      %v181 = vmul.f32 %v171, %v179
      %v182 = vmul.f32 %v172, %v179
      %v183 = vmul.f32 %v173, %v179
      %v184 = vmul.f32 %v174, %v179
      %v185 = vld [vmem:[%s2] sm:$0xff]
      %187 = vset.pattern.permute.xlu0 0
      %188 = vperm.xlu0 %187, %v185
      %v189 = vpop.permute.xlu0 %188
      %v191 = vadd.f32 %v181, %v189
      %v192 = vadd.f32 %v182, %v189
      %v193 = vadd.f32 %v183, %v189
      %v194 = vadd.f32 %v184, %v189
      %195 = vst [vmem:[%s170] sm:$0xff] %v191
      %196 = vst [vmem:[%s170 + $0x8] sm:$0xff] %v192
      %197 = vst [vmem:[%s170 + $0x10] sm:$0xff] %v193
      %198 = vst [vmem:[%s170 + $0x18] sm:$0xff] %v194
      %p199 = scmp.lt.s32.totalorder %s14, 1
      %s200 = scalar_select %p199, %s14, 1
      %s201 = smul.addr %s200, 4
      %s202 = smul.addr %s201, 8
      %s203 = scalar_lea.vmem %s3, %s202
      // Predicated region
      $region33: #{one_node_forward.3} parent=31 // pred_check
        %p204 = pneg %p100
      $region34: #{one_node_forward.3} parent=31 // pred_check_branch
        %206 = sbr.rel (%p204) target = $region36
      $region35: #{one_node_forward.3} parent=31 // pred_region
        _
      $region36: #{one_node_forward.3} parent=31 // pred_fallthru
        _
    $region32: #{one_node_forward.3} parent=5 // pred_fallthru
      _
    %p207 = scmp.le.s32.totalorder 2, %s9
    // Predicated region
    $region37: #{one_node_forward.3} parent=5 // pred_check
      %p208 = pneg %p207
    $region38: #{one_node_forward.3} parent=5 // pred_check_branch
      %210 = sbr.rel (%p208) target = $region40
    $region39: #{one_node_forward.3} parent=5 // pred_region
      %s211 = ssub.s32 %s9, 2
      // Predicated region
      $region41: #{one_node_forward.3} parent=39 // pred_check
        %p212 = pneg %p106
      $region42: #{one_node_forward.3} parent=39 // pred_check_branch
        %214 = sbr.rel (%p212) target = $region44
      $region43: #{one_node_forward.3} parent=39 // pred_region
        %p215 = scmp.lt.s32.totalorder %s15, 1
        %s216 = scalar_select %p215, %s15, 1
        %s217 = smul.addr %s216, 4
        %s218 = smul.addr %s217, 8
        %s219 = scalar_lea.vmem %s3, %s218
      $region44: #{one_node_forward.3} parent=39 // pred_fallthru
        _
    $region40: #{one_node_forward.3} parent=5 // pred_fallthru
      _
  $region6: #{one_node_forward.3} parent=0 // loop_footer
    %s13 = sadd.s32 1, %s9
  $region7: #{one_node_forward.3} parent=0 // loop_footer_branch
    %8 = sbr.rel target = $region3
  $region8: #{one_node_forward.3} parent=0 // loop_exit
    _

// kernel: one_node_forward.2
$region0: #{one_node_forward.2}
  #allocation0 [shape = 'u32[]', space=smem, size = 0x4, offset = 0x4, fixed_abs, tag = 'smem constant byte address 0x4 - core index']
  #allocation1 [shape = 'u32[72,128]{1,0:T(1,128)}', space=vmem, size = 0x9000, scoped, tag = 'internal scratch']
  %s0 = inlined_call_operand.vmem [shape: bf16[2,4,550], index: 0, kind: input, shape index: {}]
  %s1 = inlined_call_operand.vmem [shape: bf16[9,8,4], index: 1, kind: input, shape index: {}]
  %s2 = inlined_call_operand.vmem [shape: f32[2,1,512], index: 2, kind: input, shape index: {}]
  %s3 = inlined_call_operand.vmem [shape: f32[2,8,512], index: 3, kind: output, shape index: {0}]
  %s4 = inlined_call_operand.vmem [shape: f32[2,8,1], index: 4, kind: output, shape index: {1}]
  %s5 = inlined_call_operand.vmem [shape: f32[2,8,1], index: 5, kind: output, shape index: {2}]
  %6 = xla_tuple %s3, %s4, %s5
  %s7 = sld [smem:[#allocation0]]
  $region61: #{one_node_forward.2} parent=0
    _
  %s9 = ssub.s32 1, %s7
  %s10 = scalar_select 0, %s9, %s7
  loop: start=0, step=1, limit=4
  $region2: #{one_node_forward.2} parent=0 // loop_pre_header
    _
  $region3: #{one_node_forward.2} parent=0 // loop_header
    %s12 = sphi 0, %s16
    %p13 = scmp.ge.s32.totalorder %s12, 4
    %s22 = sphi 0, %s24
    %s25 = sphi 0, %s22
    %s26 = sphi 0, %s25
    %s42 = sphi 0, %s26
    %s46 = sphi 0, %s46
    %s48 = sphi 0, %s46
    %s49 = sphi 0, %s48
    %s63 = sphi 0, %s49
    %s69 = sphi 0, %s71
    %s72 = sphi 0, %s69
    %s73 = sphi 0, %s72
    %s89 = sphi 0, %s73
    %s95 = sphi 0, %s97
    %s98 = sphi 0, %s95
    %s99 = sphi 0, %s98
    %s115 = sphi 0, %s99
    %s121 = sphi 0, %s123
    %s124 = sphi 0, %s121
    %s125 = sphi 0, %s124
    %s141 = sphi 0, %s125
    %s147 = sphi 0, %s149
    %s150 = sphi 0, %s147
    %s151 = sphi 0, %s150
    %s167 = sphi 0, %s151
  $region4: #{one_node_forward.2} parent=0 // loop_header_branch
    %15 = sbr.rel (%p13) target = $region8
  $region5: #{one_node_forward.2} parent=0 // loop_body
    %s17 = ssub.s32 %s12, 1
    %s18 = ssub.s32 %s12, 2
    %s19 = sadd.s32 %s12, 1
    %s20 = ssub.s32 %s12, %s19
    %p21 = scmp.eq.s32.totalorder %s20, 0
    %s23 = sadd.s32 %s22, 1
    %s24 = scalar_select %p21, %s22, %s23
    %p27 = pneg %p21
    %p28 = scmp.eq.s32.totalorder %s12, 1
    %p29 = por %p27, %p28
    %p30 = scmp.ne.s32.totalorder %s22, %s25
    %p31 = scmp.eq.s32.totalorder %s12, 0
    %p32 = por %p30, %p31
    %p33 = scmp.ne.s32.totalorder %s22, %s25
    %p34 = scmp.eq.s32.totalorder %s17, 1
    %p35 = por %p33, %p34
    %p36 = scmp.ne.s32.totalorder %s25, %s26
    %p37 = scmp.eq.s32.totalorder %s17, 0
    %p38 = por %p36, %p37
    %p39 = scmp.ne.s32.totalorder %s25, %s26
    %p40 = scmp.eq.s32.totalorder %s18, 1
    %p41 = por %p39, %p40
    %p43 = scmp.ne.s32.totalorder %s26, %s42
    %p44 = scmp.eq.s32.totalorder %s18, 0
    %p45 = por %p43, %p44
    %s47 = sadd.s32 %s46, 1
    %p50 = scmp.eq.s32.totalorder %s12, 1
    %p51 = scmp.ne.s32.totalorder %s46, %s48
    %p52 = scmp.eq.s32.totalorder %s12, 0
    %p53 = por %p51, %p52
    %p54 = scmp.ne.s32.totalorder %s46, %s48
    %p55 = scmp.eq.s32.totalorder %s17, 1
    %p56 = por %p54, %p55
    %p57 = scmp.ne.s32.totalorder %s48, %s49
    %p58 = scmp.eq.s32.totalorder %s17, 0
    %p59 = por %p57, %p58
    %p60 = scmp.ne.s32.totalorder %s48, %s49
    %p61 = scmp.eq.s32.totalorder %s18, 1
    %p62 = por %p60, %p61
    %p64 = scmp.ne.s32.totalorder %s49, %s63
    %p65 = scmp.eq.s32.totalorder %s18, 0
    %p66 = por %p64, %p65
    %s67 = ssub.s32 %s12, %s19
    %p68 = scmp.eq.s32.totalorder %s67, 0
    %s70 = sadd.s32 %s69, 1
    %s71 = scalar_select %p68, %s69, %s70
    %p74 = pneg %p68
    %p75 = scmp.eq.s32.totalorder %s12, 1
    %p76 = por %p74, %p75
    %p77 = scmp.ne.s32.totalorder %s69, %s72
    %p78 = scmp.eq.s32.totalorder %s12, 0
    %p79 = por %p77, %p78
    %p80 = scmp.ne.s32.totalorder %s69, %s72
    %p81 = scmp.eq.s32.totalorder %s17, 1
    %p82 = por %p80, %p81
    %p83 = scmp.ne.s32.totalorder %s72, %s73
    %p84 = scmp.eq.s32.totalorder %s17, 0
    %p85 = por %p83, %p84
    %p86 = scmp.ne.s32.totalorder %s72, %s73
    %p87 = scmp.eq.s32.totalorder %s18, 1
    %p88 = por %p86, %p87
    %p90 = scmp.ne.s32.totalorder %s73, %s89
    %p91 = scmp.eq.s32.totalorder %s18, 0
    %p92 = por %p90, %p91
    %s93 = ssub.s32 %s12, %s19
    %p94 = scmp.eq.s32.totalorder %s93, 0
    %s96 = sadd.s32 %s95, 1
    %s97 = scalar_select %p94, %s95, %s96
    %p100 = pneg %p94
    %p101 = scmp.eq.s32.totalorder %s12, 1
    %p102 = por %p100, %p101
    %p103 = scmp.ne.s32.totalorder %s95, %s98
    %p104 = scmp.eq.s32.totalorder %s12, 0
    %p105 = por %p103, %p104
    %p106 = scmp.ne.s32.totalorder %s95, %s98
    %p107 = scmp.eq.s32.totalorder %s17, 1
    %p108 = por %p106, %p107
    %p109 = scmp.ne.s32.totalorder %s98, %s99
    %p110 = scmp.eq.s32.totalorder %s17, 0
    %p111 = por %p109, %p110
    %p112 = scmp.ne.s32.totalorder %s98, %s99
    %p113 = scmp.eq.s32.totalorder %s18, 1
    %p114 = por %p112, %p113
    %p116 = scmp.ne.s32.totalorder %s99, %s115
    %p117 = scmp.eq.s32.totalorder %s18, 0
    %p118 = por %p116, %p117
    %s119 = ssub.s32 %s12, %s19
    %p120 = scmp.eq.s32.totalorder %s119, 0
    %s122 = sadd.s32 %s121, 1
    %s123 = scalar_select %p120, %s121, %s122
    %p126 = pneg %p120
    %p127 = scmp.eq.s32.totalorder %s12, 1
    %p128 = por %p126, %p127
    %p129 = scmp.ne.s32.totalorder %s121, %s124
    %p130 = scmp.eq.s32.totalorder %s12, 0
    %p131 = por %p129, %p130
    %p132 = scmp.ne.s32.totalorder %s121, %s124
    %p133 = scmp.eq.s32.totalorder %s17, 1
    %p134 = por %p132, %p133
    %p135 = scmp.ne.s32.totalorder %s124, %s125
    %p136 = scmp.eq.s32.totalorder %s17, 0
    %p137 = por %p135, %p136
    %p138 = scmp.ne.s32.totalorder %s124, %s125
    %p139 = scmp.eq.s32.totalorder %s18, 1
    %p140 = por %p138, %p139
    %p142 = scmp.ne.s32.totalorder %s125, %s141
    %p143 = scmp.eq.s32.totalorder %s18, 0
    %p144 = por %p142, %p143
    %s145 = ssub.s32 %s12, %s19
    %p146 = scmp.eq.s32.totalorder %s145, 0
    %s148 = sadd.s32 %s147, 1
    %s149 = scalar_select %p146, %s147, %s148
    %p152 = pneg %p146
    %p153 = scmp.eq.s32.totalorder %s12, 1
    %p154 = por %p152, %p153
    %p155 = scmp.ne.s32.totalorder %s147, %s150
    %p156 = scmp.eq.s32.totalorder %s12, 0
    %p157 = por %p155, %p156
    %p158 = scmp.ne.s32.totalorder %s147, %s150
    %p159 = scmp.eq.s32.totalorder %s17, 1
    %p160 = por %p158, %p159
    %p161 = scmp.ne.s32.totalorder %s150, %s151
    %p162 = scmp.eq.s32.totalorder %s17, 0
    %p163 = por %p161, %p162
    %p164 = scmp.ne.s32.totalorder %s150, %s151
    %p165 = scmp.eq.s32.totalorder %s18, 1
    %p166 = por %p164, %p165
    %p168 = scmp.ne.s32.totalorder %s151, %s167
    %p169 = scmp.eq.s32.totalorder %s18, 0
    %p170 = por %p168, %p169
    %p171 = scmp.le.s32.totalorder 1, %s12
    %p172 = scmp.lt.s32.totalorder %s12, 3
    %p173 = pnand %p171, %p172
    %p174 = pneg %p173
    // Predicated region
    $region9: #{one_node_forward.2} parent=5 // pred_check
      _
    $region10: #{one_node_forward.2} parent=5 // pred_check_branch
      %176 = sbr.rel (%p173) target = $region12
    $region11: #{one_node_forward.2} parent=5 // pred_region
      %s177 = ssub.s32 %s12, 1
      // Predicated region
      $region13: #{one_node_forward.2} parent=11 // pred_check
        %p178 = pneg %p59
      $region14: #{one_node_forward.2} parent=11 // pred_check_branch
        %180 = sbr.rel (%p178) target = $region16
      $region15: #{one_node_forward.2} parent=11 // pred_region
        _
      $region16: #{one_node_forward.2} parent=11 // pred_fallthru
        _
    $region12: #{one_node_forward.2} parent=5 // pred_fallthru
      _
    %p181 = scmp.lt.s32.totalorder %s12, 2
    // Predicated region
    $region17: #{one_node_forward.2} parent=5 // pred_check
      %p182 = pneg %p181
    $region18: #{one_node_forward.2} parent=5 // pred_check_branch
      %184 = sbr.rel (%p182) target = $region20
    $region19: #{one_node_forward.2} parent=5 // pred_region
      // Predicated region
      $region21: #{one_node_forward.2} parent=19 // pred_check
        %p185 = pneg %p32
      $region22: #{one_node_forward.2} parent=19 // pred_check_branch
        %187 = sbr.rel (%p185) target = $region24
      $region23: #{one_node_forward.2} parent=19 // pred_region
        %p188 = scmp.lt.s32.totalorder %s12, 1
        %s189 = scalar_select %p188, %s12, 1
        %s190 = smul.addr %s189, 5
        %s191 = smul.addr %s190, 2
        %s192 = scalar_lea.vmem %s0, %s191
      $region24: #{one_node_forward.2} parent=19 // pred_fallthru
        _
      // Predicated region
      $region25: #{one_node_forward.2} parent=19 // pred_check
        %p193 = pneg %p79
      $region26: #{one_node_forward.2} parent=19 // pred_check_branch
        %195 = sbr.rel (%p193) target = $region28
      $region27: #{one_node_forward.2} parent=19 // pred_region
        %p196 = scmp.lt.s32.totalorder %s12, 1
        %s197 = scalar_select %p196, %s12, 1
        %s198 = smul.addr %s197, 4
        %s199 = scalar_lea.vmem %s2, %s198
      $region28: #{one_node_forward.2} parent=19 // pred_fallthru
        _
    $region20: #{one_node_forward.2} parent=5 // pred_fallthru
      _
    %p200 = scmp.le.s32.totalorder 1, %s12
    %p201 = scmp.lt.s32.totalorder %s12, 3
    %p202 = pnand %p200, %p201
    %p203 = pneg %p202
    // Predicated region
    $region29: #{one_node_forward.2} parent=5 // pred_check
      _
    $region30: #{one_node_forward.2} parent=5 // pred_check_branch
      %205 = sbr.rel (%p202) target = $region32
    $region31: #{one_node_forward.2} parent=5 // pred_region
      %s206 = ssub.s32 %s12, 1
      %p207 = scmp.lt.s32.totalorder %s17, 1
      %s208 = scalar_select %p207, %s17, 1
      %s209 = smul.addr %s208, 5
      %s210 = smul.addr %s209, 2
      %s211 = scalar_lea.vmem %s0, %s210
      %p212 = pneg %p38
      %p213 = pneg %p35
      %p214 = pneg %p59
      %p215 = pneg %p56
      %p216 = scmp.lt.s32.totalorder %s17, 1
      %s217 = scalar_select %p216, %s17, 1
      %s218 = smul.addr %s217, 4
      %s219 = scalar_lea.vmem %s2, %s218
      %p220 = pneg %p85
      %p221 = pneg %p82
      %p222 = pneg %p111
      %p223 = pneg %p108
      %p224 = scmp.lt.s32.totalorder %s17, 1
      %s225 = scalar_select %p224, %s17, 1
      %s226 = smul.addr %s225, 4
      %s227 = smul.addr %s226, 8
      %s228 = scalar_lea.vmem %s3, %s227
      %p229 = pneg %p137
      %p230 = pneg %p134
      %p231 = scmp.lt.s32.totalorder %s17, 1
      %s232 = scalar_select %p231, %s17, 1
      %s233 = smul.addr %s232, 8
      %s234 = scalar_lea.vmem %s4, %s233
      %p235 = pneg %p163
      %p236 = pneg %p160
      %p237 = scmp.lt.s32.totalorder %s17, 1
      %s238 = scalar_select %p237, %s17, 1
      %s239 = smul.addr %s238, 8
      %s240 = scalar_lea.vmem %s5, %s239
      %p241 = scmp.lt.s32.totalorder %s17, 1
      %s242 = scalar_select %p241, %s17, 1
      %s243 = smul.addr %s242, 5
      %s244 = smul.addr %s243, 2
      %s245 = scalar_lea.vmem %s0, %s244
      %p246 = scmp.lt.s32.totalorder %s17, 1
      %s247 = scalar_select %p246, %s17, 1
      %s248 = smul.addr %s247, 4
      %s249 = scalar_lea.vmem %s2, %s248
      %p250 = scmp.lt.s32.totalorder %s17, 1
      %s251 = scalar_select %p250, %s17, 1
      %s252 = smul.addr %s251, 4
      %s253 = smul.addr %s252, 8
      %s254 = scalar_lea.vmem %s3, %s253
      %p255 = scmp.lt.s32.totalorder %s17, 1
      %s256 = scalar_select %p255, %s17, 1
      %s257 = smul.addr %s256, 8
      %s258 = scalar_lea.vmem %s4, %s257
      %p259 = scmp.lt.s32.totalorder %s17, 1
      %s260 = scalar_select %p259, %s17, 1
      %s261 = smul.addr %s260, 8
      %s262 = scalar_lea.vmem %s5, %s261
      %v264 = vld [vmem:[%s245] sm:$0xff]
      %v265 = vld [vmem:[%s245 + $0x8] sm:$0x3]
      %v266 = vld [vmem:[%s1] sm:$0xf]
      %s267 = scalar_lea.vmem %s1, 4
      %v268 = vld [vmem:[%s267] sm:$0xf]
      %270 = vst [vmem:[#allocation1] ss:$4 sm:$0xff] %v264
      %s272 = scalar_lea.vmem [#allocation1], 32
      %273 = vst [vmem:[%s272] ss:$4 sm:$0xff] %v265
      %v274 = vld.sshfl [vmem:[#allocation1] sm:$0xff pattern:$0x73625140]
      %v276 = vld.sshfl [vmem:[#allocation1 + $0x8] sm:$0xff pattern:$0x73625140]
      %v278 = vld.sshfl [vmem:[#allocation1 + $0x10] sm:$0xff pattern:$0x73625140]
      %v280 = vld.sshfl [vmem:[#allocation1 + $0x18] sm:$0xff pattern:$0x73625140]
      %v282 = vld.sshfl [vmem:[#allocation1 + $0x20] sm:$0xff pattern:$0x73625140]
      %284 = vrot.lane.b32.xlu0 %v274, 127
      %v285 = vpop.permute.xlu0 %284
      %286 = vrot.lane.b32.xlu0 %v276, 127
      %v287 = vpop.permute.xlu0 %286
      %288 = vrot.lane.b32.xlu0 %v278, 127
      %v289 = vpop.permute.xlu0 %288
      %290 = vrot.lane.b32.xlu0 %v280, 127
      %v291 = vpop.permute.xlu0 %290
      %292 = vrot.lane.b32.xlu0 %v282, 127
      %v293 = vpop.permute.xlu0 %292
      %vm294 = vcmask 1039360
      %v295 = vsel %vm294, %v285, %v287
      %v296 = vsel %vm294, %v287, %v289
      %v297 = vsel %vm294, %v289, %v291
      %v298 = vsel %vm294, %v291, %v293
      %vm299 = vcmask 31744
      %v301 = vsel %vm299, %v268, 0
      %vm303 = vcmask 1041408
      %v305 = vsel %vm303, %v295, 0
      %v308 = vsel %vm303, %v296, 0
      %v311 = vsel %vm303, %v297, 0
      %v314 = vsel %vm303, %v298, 0
      %316 = vmatpush.bf16.msra.mxu0 0
      %317 = vmatpush.bf16.msra.mxu0 0
      %318 = vmatpush.bf16.msra.mxu0 0
      %319 = vmatpush.bf16.msra.mxu0 0
      %320 = vmatpush.bf16.msra.mxu0 0
      %321 = vmatpush.bf16.msra.mxu0 0
      %322 = vmatpush.bf16.msra.mxu0 0
      %323 = vmatpush.bf16.msra.mxu0 %v305
      %324 = vmatmul.bf16.gmra.mxu0 %v301
      %v325 = vpop.f32.mrf.mxu0
      %v326 = vadd.f32 0.0, %v325
      %v327 = vpop.f32.mrf.mxu0
      %328 = vdwg.mxu0
      %329 = vmatpush.bf16.msra.mxu0 0
      %330 = vmatpush.bf16.msra.mxu0 0
      %331 = vmatpush.bf16.msra.mxu0 0
      %332 = vmatpush.bf16.msra.mxu0 0
      %333 = vmatpush.bf16.msra.mxu0 0
      %334 = vmatpush.bf16.msra.mxu0 0
      %335 = vmatpush.bf16.msra.mxu0 0
      %336 = vmatpush.bf16.msra.mxu0 %v308
      %337 = vmatmul.bf16.gmra.mxu0 %v301
      %v338 = vpop.f32.mrf.mxu0
      %v339 = vadd.f32 0.0, %v338
      %v340 = vpop.f32.mrf.mxu0
      %341 = vdwg.mxu0
      %342 = vmatpush.bf16.msra.mxu0 0
      %343 = vmatpush.bf16.msra.mxu0 0
      %344 = vmatpush.bf16.msra.mxu0 0
      %345 = vmatpush.bf16.msra.mxu0 0
      %346 = vmatpush.bf16.msra.mxu0 0
      %347 = vmatpush.bf16.msra.mxu0 0
      %348 = vmatpush.bf16.msra.mxu0 0
      %349 = vmatpush.bf16.msra.mxu0 %v311
      %350 = vmatmul.bf16.gmra.mxu0 %v301
      %v351 = vpop.f32.mrf.mxu0
      %v352 = vadd.f32 0.0, %v351
      %v353 = vpop.f32.mrf.mxu0
      %354 = vdwg.mxu0
      %355 = vmatpush.bf16.msra.mxu0 0
      %356 = vmatpush.bf16.msra.mxu0 0
      %357 = vmatpush.bf16.msra.mxu0 0
      %358 = vmatpush.bf16.msra.mxu0 0
      %359 = vmatpush.bf16.msra.mxu0 0
      %360 = vmatpush.bf16.msra.mxu0 0
      %361 = vmatpush.bf16.msra.mxu0 0
      %362 = vmatpush.bf16.msra.mxu0 %v314
      %363 = vmatmul.bf16.gmra.mxu0 %v301
      %v364 = vpop.f32.mrf.mxu0
      %v365 = vadd.f32 0.0, %v364
      %v366 = vpop.f32.mrf.mxu0
      %367 = vdwg.mxu0
      %368 = vst [vmem:[#allocation1] ss:$4 sm:$0xff] %v264
      %v369 = vld.sshfl [vmem:[#allocation1] sm:$0xff pattern:$0x73625140]
      %v370 = vld.sshfl [vmem:[#allocation1 + $0x8] sm:$0xff pattern:$0x73625140]
      %v371 = vld.sshfl [vmem:[#allocation1 + $0x10] sm:$0xff pattern:$0x73625140]
      %v372 = vld.sshfl [vmem:[#allocation1 + $0x18] sm:$0xff pattern:$0x73625140]
      %v374 = vsel %vm299, %v266, 0
      %v376 = vsel %vm303, %v369, 0
      %v378 = vsel %vm303, %v370, 0
      %v380 = vsel %vm303, %v371, 0
      %v382 = vsel %vm303, %v372, 0
      %384 = vmatpush.bf16.msra.mxu0 0
      %385 = vmatpush.bf16.msra.mxu0 0
      %386 = vmatpush.bf16.msra.mxu0 0
      %387 = vmatpush.bf16.msra.mxu0 0
      %388 = vmatpush.bf16.msra.mxu0 0
      %389 = vmatpush.bf16.msra.mxu0 0
      %390 = vmatpush.bf16.msra.mxu0 0
      %391 = vmatpush.bf16.msra.mxu0 %v376
      %392 = vmatmul.bf16.gmra.mxu0 %v374
      %v393 = vpop.f32.mrf.mxu0
      %v394 = vadd.f32 %v326, %v393
      %v395 = vpop.f32.mrf.mxu0
      %396 = vdwg.mxu0
      %397 = vmatpush.bf16.msra.mxu0 0
      %398 = vmatpush.bf16.msra.mxu0 0
      %399 = vmatpush.bf16.msra.mxu0 0
      %400 = vmatpush.bf16.msra.mxu0 0
      %401 = vmatpush.bf16.msra.mxu0 0
      %402 = vmatpush.bf16.msra.mxu0 0
      %403 = vmatpush.bf16.msra.mxu0 0
      %404 = vmatpush.bf16.msra.mxu0 %v378
      %405 = vmatmul.bf16.gmra.mxu0 %v374
      %v406 = vpop.f32.mrf.mxu0
      %v407 = vadd.f32 %v339, %v406
      %v408 = vpop.f32.mrf.mxu0
      %409 = vdwg.mxu0
      %410 = vmatpush.bf16.msra.mxu0 0
      %411 = vmatpush.bf16.msra.mxu0 0
      %412 = vmatpush.bf16.msra.mxu0 0
      %413 = vmatpush.bf16.msra.mxu0 0
      %414 = vmatpush.bf16.msra.mxu0 0
      %415 = vmatpush.bf16.msra.mxu0 0
      %416 = vmatpush.bf16.msra.mxu0 0
      %417 = vmatpush.bf16.msra.mxu0 %v380
      %418 = vmatmul.bf16.gmra.mxu0 %v374
      %v419 = vpop.f32.mrf.mxu0
      %v420 = vadd.f32 %v352, %v419
      %v421 = vpop.f32.mrf.mxu0
      %422 = vdwg.mxu0
      %423 = vmatpush.bf16.msra.mxu0 0
      %424 = vmatpush.bf16.msra.mxu0 0
      %425 = vmatpush.bf16.msra.mxu0 0
      %426 = vmatpush.bf16.msra.mxu0 0
      %427 = vmatpush.bf16.msra.mxu0 0
      %428 = vmatpush.bf16.msra.mxu0 0
      %429 = vmatpush.bf16.msra.mxu0 0
      %430 = vmatpush.bf16.msra.mxu0 %v382
      %431 = vmatmul.bf16.gmra.mxu0 %v374
      %v432 = vpop.f32.mrf.mxu0
      %v433 = vadd.f32 %v365, %v432
      %v434 = vpop.f32.mrf.mxu0
      %435 = vdwg.mxu0
      %s436 = scalar_lea.vmem %s1, 8
      %v437 = vld [vmem:[%s436] sm:$0xf]
      %438 = vst [vmem:[#allocation1] ss:$4 sm:$0xff] %v264
      %s439 = scalar_lea.vmem [#allocation1], 32
      %440 = vst [vmem:[%s439] ss:$4 sm:$0xff] %v265
      %v441 = vld.sshfl [vmem:[#allocation1] sm:$0xff pattern:$0x73625140]
      %v443 = vld.sshfl [vmem:[#allocation1 + $0x8] sm:$0xff pattern:$0x73625140]
      %v445 = vld.sshfl [vmem:[#allocation1 + $0x10] sm:$0xff pattern:$0x73625140]
      %v447 = vld.sshfl [vmem:[#allocation1 + $0x18] sm:$0xff pattern:$0x73625140]
      %v449 = vld.sshfl [vmem:[#allocation1 + $0x20] sm:$0xff pattern:$0x73625140]
      %451 = vrot.lane.b32.xlu0 %v441, 126
      %v452 = vpop.permute.xlu0 %451
      %453 = vrot.lane.b32.xlu0 %v443, 126
      %v454 = vpop.permute.xlu0 %453
      %455 = vrot.lane.b32.xlu0 %v445, 126
      %v456 = vpop.permute.xlu0 %455
      %457 = vrot.lane.b32.xlu0 %v447, 126
      %v458 = vpop.permute.xlu0 %457
      %459 = vrot.lane.b32.xlu0 %v449, 126
      %v460 = vpop.permute.xlu0 %459
      %vm461 = vcmask 1031168
      %v462 = vsel %vm461, %v452, %v454
      %v463 = vsel %vm461, %v454, %v456
      %v464 = vsel %vm461, %v456, %v458
      %v465 = vsel %vm461, %v458, %v460
      %v467 = vsel %vm299, %v437, 0
      %v470 = vsel %vm303, %v462, 0
      %v473 = vsel %vm303, %v463, 0
      %v476 = vsel %vm303, %v464, 0
      %v479 = vsel %vm303, %v465, 0
      %481 = vmatpush.bf16.msra.mxu0 0
      %482 = vmatpush.bf16.msra.mxu0 0
      %483 = vmatpush.bf16.msra.mxu0 0
      %484 = vmatpush.bf16.msra.mxu0 0
      %485 = vmatpush.bf16.msra.mxu0 0
      %486 = vmatpush.bf16.msra.mxu0 0
      %487 = vmatpush.bf16.msra.mxu0 0
      %488 = vmatpush.bf16.msra.mxu0 %v470
      %489 = vmatmul.bf16.gmra.mxu0 %v467
      %v490 = vpop.f32.mrf.mxu0
      %v491 = vadd.f32 0.0, %v490
      %v492 = vpop.f32.mrf.mxu0
      %493 = vdwg.mxu0
      %494 = vmatpush.bf16.msra.mxu0 0
      %495 = vmatpush.bf16.msra.mxu0 0
      %496 = vmatpush.bf16.msra.mxu0 0
      %497 = vmatpush.bf16.msra.mxu0 0
      %498 = vmatpush.bf16.msra.mxu0 0
      %499 = vmatpush.bf16.msra.mxu0 0
      %500 = vmatpush.bf16.msra.mxu0 0
      %501 = vmatpush.bf16.msra.mxu0 %v473
      %502 = vmatmul.bf16.gmra.mxu0 %v467
      %v503 = vpop.f32.mrf.mxu0
      %v504 = vadd.f32 0.0, %v503
      %v505 = vpop.f32.mrf.mxu0
      %506 = vdwg.mxu0
      %507 = vmatpush.bf16.msra.mxu0 0
      %508 = vmatpush.bf16.msra.mxu0 0
      %509 = vmatpush.bf16.msra.mxu0 0
      %510 = vmatpush.bf16.msra.mxu0 0
      %511 = vmatpush.bf16.msra.mxu0 0
      %512 = vmatpush.bf16.msra.mxu0 0
      %513 = vmatpush.bf16.msra.mxu0 0
      %514 = vmatpush.bf16.msra.mxu0 %v476
      %515 = vmatmul.bf16.gmra.mxu0 %v467
      %v516 = vpop.f32.mrf.mxu0
      %v517 = vadd.f32 0.0, %v516
      %v518 = vpop.f32.mrf.mxu0
      %519 = vdwg.mxu0
      %520 = vmatpush.bf16.msra.mxu0 0
      %521 = vmatpush.bf16.msra.mxu0 0
      %522 = vmatpush.bf16.msra.mxu0 0
      %523 = vmatpush.bf16.msra.mxu0 0
      %524 = vmatpush.bf16.msra.mxu0 0
      %525 = vmatpush.bf16.msra.mxu0 0
      %526 = vmatpush.bf16.msra.mxu0 0
      %527 = vmatpush.bf16.msra.mxu0 %v479
      %528 = vmatmul.bf16.gmra.mxu0 %v467
      %v529 = vpop.f32.mrf.mxu0
      %v530 = vadd.f32 0.0, %v529
      %v531 = vpop.f32.mrf.mxu0
      %532 = vdwg.mxu0
      %v533 = vadd.f32 %v394, %v491
      %v534 = vadd.f32 %v407, %v504
      %v535 = vadd.f32 %v420, %v517
      %v536 = vadd.f32 %v433, %v530
      %s537 = scalar_lea.vmem %s1, 12
      %v538 = vld [vmem:[%s537] sm:$0xf]
      %539 = vst [vmem:[#allocation1] ss:$4 sm:$0xff] %v264
      %s540 = scalar_lea.vmem [#allocation1], 32
      %541 = vst [vmem:[%s540] ss:$4 sm:$0xff] %v265
      %v542 = vld.sshfl [vmem:[#allocation1] sm:$0xff pattern:$0x73625140]
      %v544 = vld.sshfl [vmem:[#allocation1 + $0x8] sm:$0xff pattern:$0x73625140]
      %v546 = vld.sshfl [vmem:[#allocation1 + $0x10] sm:$0xff pattern:$0x73625140]
      %v548 = vld.sshfl [vmem:[#allocation1 + $0x18] sm:$0xff pattern:$0x73625140]
      %v550 = vld.sshfl [vmem:[#allocation1 + $0x20] sm:$0xff pattern:$0x73625140]
      %552 = vrot.lane.b32.xlu0 %v542, 110
      %v553 = vpop.permute.xlu0 %552
      %554 = vrot.lane.b32.xlu0 %v544, 110
      %v555 = vpop.permute.xlu0 %554
      %556 = vrot.lane.b32.xlu0 %v546, 110
      %v557 = vpop.permute.xlu0 %556
      %558 = vrot.lane.b32.xlu0 %v548, 110
      %v559 = vpop.permute.xlu0 %558
      %560 = vrot.lane.b32.xlu0 %v550, 110
      %v561 = vpop.permute.xlu0 %560
      %vm562 = vcmask 900096
      %v563 = vsel %vm562, %v553, %v555
      %v564 = vsel %vm562, %v555, %v557
      %v565 = vsel %vm562, %v557, %v559
      %v566 = vsel %vm562, %v559, %v561
      %v568 = vsel %vm299, %v538, 0
      %v571 = vsel %vm303, %v563, 0
      %v574 = vsel %vm303, %v564, 0
      %v577 = vsel %vm303, %v565, 0
      %v580 = vsel %vm303, %v566, 0
      %582 = vmatpush.bf16.msra.mxu0 0
      %583 = vmatpush.bf16.msra.mxu0 0
      %584 = vmatpush.bf16.msra.mxu0 0
      %585 = vmatpush.bf16.msra.mxu0 0
      %586 = vmatpush.bf16.msra.mxu0 0
      %587 = vmatpush.bf16.msra.mxu0 0
      %588 = vmatpush.bf16.msra.mxu0 0
      %589 = vmatpush.bf16.msra.mxu0 %v571
      %590 = vmatmul.bf16.gmra.mxu0 %v568
      %v591 = vpop.f32.mrf.mxu0
      %v592 = vadd.f32 0.0, %v591
      %v593 = vpop.f32.mrf.mxu0
      %594 = vdwg.mxu0
      %595 = vmatpush.bf16.msra.mxu0 0
      %596 = vmatpush.bf16.msra.mxu0 0
      %597 = vmatpush.bf16.msra.mxu0 0
      %598 = vmatpush.bf16.msra.mxu0 0
      %599 = vmatpush.bf16.msra.mxu0 0
      %600 = vmatpush.bf16.msra.mxu0 0
      %601 = vmatpush.bf16.msra.mxu0 0
      %602 = vmatpush.bf16.msra.mxu0 %v574
      %603 = vmatmul.bf16.gmra.mxu0 %v568
      %v604 = vpop.f32.mrf.mxu0
      %v605 = vadd.f32 0.0, %v604
      %v606 = vpop.f32.mrf.mxu0
      %607 = vdwg.mxu0
      %608 = vmatpush.bf16.msra.mxu0 0
      %609 = vmatpush.bf16.msra.mxu0 0
      %610 = vmatpush.bf16.msra.mxu0 0
      %611 = vmatpush.bf16.msra.mxu0 0
      %612 = vmatpush.bf16.msra.mxu0 0
      %613 = vmatpush.bf16.msra.mxu0 0
      %614 = vmatpush.bf16.msra.mxu0 0
      %615 = vmatpush.bf16.msra.mxu0 %v577
      %616 = vmatmul.bf16.gmra.mxu0 %v568
      %v617 = vpop.f32.mrf.mxu0
      %v618 = vadd.f32 0.0, %v617
      %v619 = vpop.f32.mrf.mxu0
      %620 = vdwg.mxu0
      %621 = vmatpush.bf16.msra.mxu0 0
      %622 = vmatpush.bf16.msra.mxu0 0
      %623 = vmatpush.bf16.msra.mxu0 0
      %624 = vmatpush.bf16.msra.mxu0 0
      %625 = vmatpush.bf16.msra.mxu0 0
      %626 = vmatpush.bf16.msra.mxu0 0
      %627 = vmatpush.bf16.msra.mxu0 0
      %628 = vmatpush.bf16.msra.mxu0 %v580
      %629 = vmatmul.bf16.gmra.mxu0 %v568
      %v630 = vpop.f32.mrf.mxu0
      %v631 = vadd.f32 0.0, %v630
      %v632 = vpop.f32.mrf.mxu0
      %633 = vdwg.mxu0
      %v634 = vadd.f32 %v533, %v592
      %v635 = vadd.f32 %v534, %v605
      %v636 = vadd.f32 %v535, %v618
      %v637 = vadd.f32 %v536, %v631
      %s638 = scalar_lea.vmem %s1, 16
      %v639 = vld [vmem:[%s638] sm:$0xf]
      %640 = vst [vmem:[#allocation1] ss:$4 sm:$0xff] %v264
      %s641 = scalar_lea.vmem [#allocation1], 32
      %642 = vst [vmem:[%s641] ss:$4 sm:$0xff] %v265
      %v643 = vld.sshfl [vmem:[#allocation1] sm:$0xff pattern:$0x73625140]
      %v645 = vld.sshfl [vmem:[#allocation1 + $0x8] sm:$0xff pattern:$0x73625140]
      %v647 = vld.sshfl [vmem:[#allocation1 + $0x10] sm:$0xff pattern:$0x73625140]
      %v649 = vld.sshfl [vmem:[#allocation1 + $0x18] sm:$0xff pattern:$0x73625140]
      %v651 = vld.sshfl [vmem:[#allocation1 + $0x20] sm:$0xff pattern:$0x73625140]
      %653 = vrot.lane.b32.xlu0 %v643, 109
      %v654 = vpop.permute.xlu0 %653
      %655 = vrot.lane.b32.xlu0 %v645, 109
      %v656 = vpop.permute.xlu0 %655
      %657 = vrot.lane.b32.xlu0 %v647, 109
      %v658 = vpop.permute.xlu0 %657
      %659 = vrot.lane.b32.xlu0 %v649, 109
      %v660 = vpop.permute.xlu0 %659
      %661 = vrot.lane.b32.xlu0 %v651, 109
      %v662 = vpop.permute.xlu0 %661
      %vm663 = vcmask 891904
      %v664 = vsel %vm663, %v654, %v656
      %v665 = vsel %vm663, %v656, %v658
      %v666 = vsel %vm663, %v658, %v660
      %v667 = vsel %vm663, %v660, %v662
      %v669 = vsel %vm299, %v639, 0
      %v672 = vsel %vm303, %v664, 0
      %v675 = vsel %vm303, %v665, 0
      %v678 = vsel %vm303, %v666, 0
      %v681 = vsel %vm303, %v667, 0
      %683 = vmatpush.bf16.msra.mxu0 0
      %684 = vmatpush.bf16.msra.mxu0 0
      %685 = vmatpush.bf16.msra.mxu0 0
      %686 = vmatpush.bf16.msra.mxu0 0
      %687 = vmatpush.bf16.msra.mxu0 0
      %688 = vmatpush.bf16.msra.mxu0 0
      %689 = vmatpush.bf16.msra.mxu0 0
      %690 = vmatpush.bf16.msra.mxu0 %v672
      %691 = vmatmul.bf16.gmra.mxu0 %v669
      %v692 = vpop.f32.mrf.mxu0
      %v693 = vadd.f32 0.0, %v692
      %v694 = vpop.f32.mrf.mxu0
      %695 = vdwg.mxu0
      %696 = vmatpush.bf16.msra.mxu0 0
      %697 = vmatpush.bf16.msra.mxu0 0
      %698 = vmatpush.bf16.msra.mxu0 0
      %699 = vmatpush.bf16.msra.mxu0 0
      %700 = vmatpush.bf16.msra.mxu0 0
      %701 = vmatpush.bf16.msra.mxu0 0
      %702 = vmatpush.bf16.msra.mxu0 0
      %703 = vmatpush.bf16.msra.mxu0 %v675
      %704 = vmatmul.bf16.gmra.mxu0 %v669
      %v705 = vpop.f32.mrf.mxu0
      %v706 = vadd.f32 0.0, %v705
      %v707 = vpop.f32.mrf.mxu0
      %708 = vdwg.mxu0
      %709 = vmatpush.bf16.msra.mxu0 0
      %710 = vmatpush.bf16.msra.mxu0 0
      %711 = vmatpush.bf16.msra.mxu0 0
      %712 = vmatpush.bf16.msra.mxu0 0
      %713 = vmatpush.bf16.msra.mxu0 0
      %714 = vmatpush.bf16.msra.mxu0 0
      %715 = vmatpush.bf16.msra.mxu0 0
      %716 = vmatpush.bf16.msra.mxu0 %v678
      %717 = vmatmul.bf16.gmra.mxu0 %v669
      %v718 = vpop.f32.mrf.mxu0
      %v719 = vadd.f32 0.0, %v718
      %v720 = vpop.f32.mrf.mxu0
      %721 = vdwg.mxu0
      %722 = vmatpush.bf16.msra.mxu0 0
      %723 = vmatpush.bf16.msra.mxu0 0
      %724 = vmatpush.bf16.msra.mxu0 0
      %725 = vmatpush.bf16.msra.mxu0 0
      %726 = vmatpush.bf16.msra.mxu0 0
      %727 = vmatpush.bf16.msra.mxu0 0
      %728 = vmatpush.bf16.msra.mxu0 0
      %729 = vmatpush.bf16.msra.mxu0 %v681
      %730 = vmatmul.bf16.gmra.mxu0 %v669
      %v731 = vpop.f32.mrf.mxu0
      %v732 = vadd.f32 0.0, %v731
      %v733 = vpop.f32.mrf.mxu0
      %734 = vdwg.mxu0
      %v735 = vadd.f32 %v634, %v693
      %v736 = vadd.f32 %v635, %v706
      %v737 = vadd.f32 %v636, %v719
      %v738 = vadd.f32 %v637, %v732
      %s739 = scalar_lea.vmem %s1, 20
      %v740 = vld [vmem:[%s739] sm:$0xf]
      %741 = vst [vmem:[#allocation1] ss:$4 sm:$0xff] %v264
      %s742 = scalar_lea.vmem [#allocation1], 32
      %743 = vst [vmem:[%s742] ss:$4 sm:$0xff] %v265
      %v744 = vld.sshfl [vmem:[#allocation1] sm:$0xff pattern:$0x73625140]
      %v746 = vld.sshfl [vmem:[#allocation1 + $0x8] sm:$0xff pattern:$0x73625140]
      %v748 = vld.sshfl [vmem:[#allocation1 + $0x10] sm:$0xff pattern:$0x73625140]
      %v750 = vld.sshfl [vmem:[#allocation1 + $0x18] sm:$0xff pattern:$0x73625140]
      %v752 = vld.sshfl [vmem:[#allocation1 + $0x20] sm:$0xff pattern:$0x73625140]
      %754 = vrot.lane.b32.xlu0 %v744, 108
      %v755 = vpop.permute.xlu0 %754
      %756 = vrot.lane.b32.xlu0 %v746, 108
      %v757 = vpop.permute.xlu0 %756
      %758 = vrot.lane.b32.xlu0 %v748, 108
      %v759 = vpop.permute.xlu0 %758
      %760 = vrot.lane.b32.xlu0 %v750, 108
      %v761 = vpop.permute.xlu0 %760
      %762 = vrot.lane.b32.xlu0 %v752, 108
      %v763 = vpop.permute.xlu0 %762
      %vm764 = vcmask 883712
      %v765 = vsel %vm764, %v755, %v757
      %v766 = vsel %vm764, %v757, %v759
      %v767 = vsel %vm764, %v759, %v761
      %v768 = vsel %vm764, %v761, %v763
      %v770 = vsel %vm299, %v740, 0
      %v773 = vsel %vm303, %v765, 0
      %v776 = vsel %vm303, %v766, 0
      %v779 = vsel %vm303, %v767, 0
      %v782 = vsel %vm303, %v768, 0
      %784 = vmatpush.bf16.msra.mxu0 0
      %785 = vmatpush.bf16.msra.mxu0 0
      %786 = vmatpush.bf16.msra.mxu0 0
      %787 = vmatpush.bf16.msra.mxu0 0
      %788 = vmatpush.bf16.msra.mxu0 0
      %789 = vmatpush.bf16.msra.mxu0 0
      %790 = vmatpush.bf16.msra.mxu0 0
      %791 = vmatpush.bf16.msra.mxu0 %v773
      %792 = vmatmul.bf16.gmra.mxu0 %v770
      %v793 = vpop.f32.mrf.mxu0
      %v794 = vadd.f32 0.0, %v793
      %v795 = vpop.f32.mrf.mxu0
      %796 = vdwg.mxu0
      %797 = vmatpush.bf16.msra.mxu0 0
      %798 = vmatpush.bf16.msra.mxu0 0
      %799 = vmatpush.bf16.msra.mxu0 0
      %800 = vmatpush.bf16.msra.mxu0 0
      %801 = vmatpush.bf16.msra.mxu0 0
      %802 = vmatpush.bf16.msra.mxu0 0
      %803 = vmatpush.bf16.msra.mxu0 0
      %804 = vmatpush.bf16.msra.mxu0 %v776
      %805 = vmatmul.bf16.gmra.mxu0 %v770
      %v806 = vpop.f32.mrf.mxu0
      %v807 = vadd.f32 0.0, %v806
      %v808 = vpop.f32.mrf.mxu0
      %809 = vdwg.mxu0
      %810 = vmatpush.bf16.msra.mxu0 0
      %811 = vmatpush.bf16.msra.mxu0 0
      %812 = vmatpush.bf16.msra.mxu0 0
      %813 = vmatpush.bf16.msra.mxu0 0
      %814 = vmatpush.bf16.msra.mxu0 0
      %815 = vmatpush.bf16.msra.mxu0 0
      %816 = vmatpush.bf16.msra.mxu0 0
      %817 = vmatpush.bf16.msra.mxu0 %v779
      %818 = vmatmul.bf16.gmra.mxu0 %v770
      %v819 = vpop.f32.mrf.mxu0
      %v820 = vadd.f32 0.0, %v819
      %v821 = vpop.f32.mrf.mxu0
      %822 = vdwg.mxu0
      %823 = vmatpush.bf16.msra.mxu0 0
      %824 = vmatpush.bf16.msra.mxu0 0
      %825 = vmatpush.bf16.msra.mxu0 0
      %826 = vmatpush.bf16.msra.mxu0 0
      %827 = vmatpush.bf16.msra.mxu0 0
      %828 = vmatpush.bf16.msra.mxu0 0
      %829 = vmatpush.bf16.msra.mxu0 0
      %830 = vmatpush.bf16.msra.mxu0 %v782
      %831 = vmatmul.bf16.gmra.mxu0 %v770
      %v832 = vpop.f32.mrf.mxu0
      %v833 = vadd.f32 0.0, %v832
      %v834 = vpop.f32.mrf.mxu0
      %835 = vdwg.mxu0
      %v836 = vadd.f32 %v735, %v794
      %v837 = vadd.f32 %v736, %v807
      %v838 = vadd.f32 %v737, %v820
      %v839 = vadd.f32 %v738, %v833
      %s840 = scalar_lea.vmem %s1, 24
      %v841 = vld [vmem:[%s840] sm:$0xf]
      %842 = vst [vmem:[#allocation1] ss:$4 sm:$0xff] %v264
      %s843 = scalar_lea.vmem [#allocation1], 32
      %844 = vst [vmem:[%s843] ss:$4 sm:$0xff] %v265
      %v845 = vld.sshfl [vmem:[#allocation1] sm:$0xff pattern:$0x73625140]
      %v847 = vld.sshfl [vmem:[#allocation1 + $0x8] sm:$0xff pattern:$0x73625140]
      %v849 = vld.sshfl [vmem:[#allocation1 + $0x10] sm:$0xff pattern:$0x73625140]
      %v851 = vld.sshfl [vmem:[#allocation1 + $0x18] sm:$0xff pattern:$0x73625140]
      %v853 = vld.sshfl [vmem:[#allocation1 + $0x20] sm:$0xff pattern:$0x73625140]
      %855 = vrot.lane.b32.xlu0 %v845, 92
      %v856 = vpop.permute.xlu0 %855
      %857 = vrot.lane.b32.xlu0 %v847, 92
      %v858 = vpop.permute.xlu0 %857
      %859 = vrot.lane.b32.xlu0 %v849, 92
      %v860 = vpop.permute.xlu0 %859
      %861 = vrot.lane.b32.xlu0 %v851, 92
      %v862 = vpop.permute.xlu0 %861
      %863 = vrot.lane.b32.xlu0 %v853, 92
      %v864 = vpop.permute.xlu0 %863
      %vm865 = vcmask 752640
      %v866 = vsel %vm865, %v856, %v858
      %v867 = vsel %vm865, %v858, %v860
      %v868 = vsel %vm865, %v860, %v862
      %v869 = vsel %vm865, %v862, %v864
      %v871 = vsel %vm299, %v841, 0
      %v874 = vsel %vm303, %v866, 0
      %v877 = vsel %vm303, %v867, 0
      %v880 = vsel %vm303, %v868, 0
      %v883 = vsel %vm303, %v869, 0
      %885 = vmatpush.bf16.msra.mxu0 0
      %886 = vmatpush.bf16.msra.mxu0 0
      %887 = vmatpush.bf16.msra.mxu0 0
      %888 = vmatpush.bf16.msra.mxu0 0
      %889 = vmatpush.bf16.msra.mxu0 0
      %890 = vmatpush.bf16.msra.mxu0 0
      %891 = vmatpush.bf16.msra.mxu0 0
      %892 = vmatpush.bf16.msra.mxu0 %v874
      %893 = vmatmul.bf16.gmra.mxu0 %v871
      %v894 = vpop.f32.mrf.mxu0
      %v895 = vadd.f32 0.0, %v894
      %v896 = vpop.f32.mrf.mxu0
      %897 = vdwg.mxu0
      %898 = vmatpush.bf16.msra.mxu0 0
      %899 = vmatpush.bf16.msra.mxu0 0
      %900 = vmatpush.bf16.msra.mxu0 0
      %901 = vmatpush.bf16.msra.mxu0 0
      %902 = vmatpush.bf16.msra.mxu0 0
      %903 = vmatpush.bf16.msra.mxu0 0
      %904 = vmatpush.bf16.msra.mxu0 0
      %905 = vmatpush.bf16.msra.mxu0 %v877
      %906 = vmatmul.bf16.gmra.mxu0 %v871
      %v907 = vpop.f32.mrf.mxu0
      %v908 = vadd.f32 0.0, %v907
      %v909 = vpop.f32.mrf.mxu0
      %910 = vdwg.mxu0
      %911 = vmatpush.bf16.msra.mxu0 0
      %912 = vmatpush.bf16.msra.mxu0 0
      %913 = vmatpush.bf16.msra.mxu0 0
      %914 = vmatpush.bf16.msra.mxu0 0
      %915 = vmatpush.bf16.msra.mxu0 0
      %916 = vmatpush.bf16.msra.mxu0 0
      %917 = vmatpush.bf16.msra.mxu0 0
      %918 = vmatpush.bf16.msra.mxu0 %v880
      %919 = vmatmul.bf16.gmra.mxu0 %v871
      %v920 = vpop.f32.mrf.mxu0
      %v921 = vadd.f32 0.0, %v920
      %v922 = vpop.f32.mrf.mxu0
      %923 = vdwg.mxu0
      %924 = vmatpush.bf16.msra.mxu0 0
      %925 = vmatpush.bf16.msra.mxu0 0
      %926 = vmatpush.bf16.msra.mxu0 0
      %927 = vmatpush.bf16.msra.mxu0 0
      %928 = vmatpush.bf16.msra.mxu0 0
      %929 = vmatpush.bf16.msra.mxu0 0
      %930 = vmatpush.bf16.msra.mxu0 0
      %931 = vmatpush.bf16.msra.mxu0 %v883
      %932 = vmatmul.bf16.gmra.mxu0 %v871
      %v933 = vpop.f32.mrf.mxu0
      %v934 = vadd.f32 0.0, %v933
      %v935 = vpop.f32.mrf.mxu0
      %936 = vdwg.mxu0
      %v937 = vadd.f32 %v836, %v895
      %v938 = vadd.f32 %v837, %v908
      %v939 = vadd.f32 %v838, %v921
      %v940 = vadd.f32 %v839, %v934
      %s941 = scalar_lea.vmem %s1, 28
      %v942 = vld [vmem:[%s941] sm:$0xf]
      %943 = vst [vmem:[#allocation1] ss:$4 sm:$0xff] %v264
      %s944 = scalar_lea.vmem [#allocation1], 32
      %945 = vst [vmem:[%s944] ss:$4 sm:$0xff] %v265
      %v946 = vld.sshfl [vmem:[#allocation1] sm:$0xff pattern:$0x73625140]
      %v948 = vld.sshfl [vmem:[#allocation1 + $0x8] sm:$0xff pattern:$0x73625140]
      %v950 = vld.sshfl [vmem:[#allocation1 + $0x10] sm:$0xff pattern:$0x73625140]
      %v952 = vld.sshfl [vmem:[#allocation1 + $0x18] sm:$0xff pattern:$0x73625140]
      %v954 = vld.sshfl [vmem:[#allocation1 + $0x20] sm:$0xff pattern:$0x73625140]
      %956 = vrot.lane.b32.xlu0 %v946, 91
      %v957 = vpop.permute.xlu0 %956
      %958 = vrot.lane.b32.xlu0 %v948, 91
      %v959 = vpop.permute.xlu0 %958
      %960 = vrot.lane.b32.xlu0 %v950, 91
      %v961 = vpop.permute.xlu0 %960
      %962 = vrot.lane.b32.xlu0 %v952, 91
      %v963 = vpop.permute.xlu0 %962
      %964 = vrot.lane.b32.xlu0 %v954, 91
      %v965 = vpop.permute.xlu0 %964
      %vm966 = vcmask 744448
      %v967 = vsel %vm966, %v957, %v959
      %v968 = vsel %vm966, %v959, %v961
      %v969 = vsel %vm966, %v961, %v963
      %v970 = vsel %vm966, %v963, %v965
      %v972 = vsel %vm299, %v942, 0
      %v975 = vsel %vm303, %v967, 0
      %v978 = vsel %vm303, %v968, 0
      %v981 = vsel %vm303, %v969, 0
      %v984 = vsel %vm303, %v970, 0
      %986 = vmatpush.bf16.msra.mxu0 0
      %987 = vmatpush.bf16.msra.mxu0 0
      %988 = vmatpush.bf16.msra.mxu0 0
      %989 = vmatpush.bf16.msra.mxu0 0
      %990 = vmatpush.bf16.msra.mxu0 0
      %991 = vmatpush.bf16.msra.mxu0 0
      %992 = vmatpush.bf16.msra.mxu0 0
      %993 = vmatpush.bf16.msra.mxu0 %v975
      %994 = vmatmul.bf16.gmra.mxu0 %v972
      %v995 = vpop.f32.mrf.mxu0
      %v996 = vadd.f32 0.0, %v995
      %v997 = vpop.f32.mrf.mxu0
      %998 = vdwg.mxu0
      %999 = vmatpush.bf16.msra.mxu0 0
      %1000 = vmatpush.bf16.msra.mxu0 0
      %1001 = vmatpush.bf16.msra.mxu0 0
      %1002 = vmatpush.bf16.msra.mxu0 0
      %1003 = vmatpush.bf16.msra.mxu0 0
      %1004 = vmatpush.bf16.msra.mxu0 0
      %1005 = vmatpush.bf16.msra.mxu0 0
      %1006 = vmatpush.bf16.msra.mxu0 %v978
      %1007 = vmatmul.bf16.gmra.mxu0 %v972
      %v1008 = vpop.f32.mrf.mxu0
      %v1009 = vadd.f32 0.0, %v1008
      %v1010 = vpop.f32.mrf.mxu0
      %1011 = vdwg.mxu0
      %1012 = vmatpush.bf16.msra.mxu0 0
      %1013 = vmatpush.bf16.msra.mxu0 0
      %1014 = vmatpush.bf16.msra.mxu0 0
      %1015 = vmatpush.bf16.msra.mxu0 0
      %1016 = vmatpush.bf16.msra.mxu0 0
      %1017 = vmatpush.bf16.msra.mxu0 0
      %1018 = vmatpush.bf16.msra.mxu0 0
      %1019 = vmatpush.bf16.msra.mxu0 %v981
      %1020 = vmatmul.bf16.gmra.mxu0 %v972
      %v1021 = vpop.f32.mrf.mxu0
      %v1022 = vadd.f32 0.0, %v1021
      %v1023 = vpop.f32.mrf.mxu0
      %1024 = vdwg.mxu0
      %1025 = vmatpush.bf16.msra.mxu0 0
      %1026 = vmatpush.bf16.msra.mxu0 0
      %1027 = vmatpush.bf16.msra.mxu0 0
      %1028 = vmatpush.bf16.msra.mxu0 0
      %1029 = vmatpush.bf16.msra.mxu0 0
      %1030 = vmatpush.bf16.msra.mxu0 0
      %1031 = vmatpush.bf16.msra.mxu0 0
      %1032 = vmatpush.bf16.msra.mxu0 %v984
      %1033 = vmatmul.bf16.gmra.mxu0 %v972
      %v1034 = vpop.f32.mrf.mxu0
      %v1035 = vadd.f32 0.0, %v1034
      %v1036 = vpop.f32.mrf.mxu0
      %1037 = vdwg.mxu0
      %v1038 = vadd.f32 %v937, %v996
      %v1039 = vadd.f32 %v938, %v1009
      %v1040 = vadd.f32 %v939, %v1022
      %v1041 = vadd.f32 %v940, %v1035
      %s1042 = scalar_lea.vmem %s1, 32
      %v1043 = vld [vmem:[%s1042] sm:$0xf]
      %1044 = vst [vmem:[#allocation1] ss:$4 sm:$0xff] %v264
      %s1045 = scalar_lea.vmem [#allocation1], 32
      %1046 = vst [vmem:[%s1045] ss:$4 sm:$0xff] %v265
      %v1047 = vld.sshfl [vmem:[#allocation1] sm:$0xff pattern:$0x73625140]
      %v1049 = vld.sshfl [vmem:[#allocation1 + $0x8] sm:$0xff pattern:$0x73625140]
      %v1051 = vld.sshfl [vmem:[#allocation1 + $0x10] sm:$0xff pattern:$0x73625140]
      %v1053 = vld.sshfl [vmem:[#allocation1 + $0x18] sm:$0xff pattern:$0x73625140]
      %v1055 = vld.sshfl [vmem:[#allocation1 + $0x20] sm:$0xff pattern:$0x73625140]
      %1057 = vrot.lane.b32.xlu0 %v1047, 90
      %v1058 = vpop.permute.xlu0 %1057
      %1059 = vrot.lane.b32.xlu0 %v1049, 90
      %v1060 = vpop.permute.xlu0 %1059
      %1061 = vrot.lane.b32.xlu0 %v1051, 90
      %v1062 = vpop.permute.xlu0 %1061
      %1063 = vrot.lane.b32.xlu0 %v1053, 90
      %v1064 = vpop.permute.xlu0 %1063
      %1065 = vrot.lane.b32.xlu0 %v1055, 90
      %v1066 = vpop.permute.xlu0 %1065
      %vm1067 = vcmask 736256
      %v1068 = vsel %vm1067, %v1058, %v1060
      %v1069 = vsel %vm1067, %v1060, %v1062
      %v1070 = vsel %vm1067, %v1062, %v1064
      %v1071 = vsel %vm1067, %v1064, %v1066
      %v1073 = vsel %vm299, %v1043, 0
      %v1076 = vsel %vm303, %v1068, 0
      %v1079 = vsel %vm303, %v1069, 0
      %v1082 = vsel %vm303, %v1070, 0
      %v1085 = vsel %vm303, %v1071, 0
      %1087 = vmatpush.bf16.msra.mxu0 0
      %1088 = vmatpush.bf16.msra.mxu0 0
      %1089 = vmatpush.bf16.msra.mxu0 0
      %1090 = vmatpush.bf16.msra.mxu0 0
      %1091 = vmatpush.bf16.msra.mxu0 0
      %1092 = vmatpush.bf16.msra.mxu0 0
      %1093 = vmatpush.bf16.msra.mxu0 0
      %1094 = vmatpush.bf16.msra.mxu0 %v1076
      %1095 = vmatmul.bf16.gmra.mxu0 %v1073
      %v1096 = vpop.f32.mrf.mxu0
      %v1097 = vadd.f32 0.0, %v1096
      %v1098 = vpop.f32.mrf.mxu0
      %1099 = vdwg.mxu0
      %1100 = vmatpush.bf16.msra.mxu0 0
      %1101 = vmatpush.bf16.msra.mxu0 0
      %1102 = vmatpush.bf16.msra.mxu0 0
      %1103 = vmatpush.bf16.msra.mxu0 0
      %1104 = vmatpush.bf16.msra.mxu0 0
      %1105 = vmatpush.bf16.msra.mxu0 0
      %1106 = vmatpush.bf16.msra.mxu0 0
      %1107 = vmatpush.bf16.msra.mxu0 %v1079
      %1108 = vmatmul.bf16.gmra.mxu0 %v1073
      %v1109 = vpop.f32.mrf.mxu0
      %v1110 = vadd.f32 0.0, %v1109
      %v1111 = vpop.f32.mrf.mxu0
      %1112 = vdwg.mxu0
      %1113 = vmatpush.bf16.msra.mxu0 0
      %1114 = vmatpush.bf16.msra.mxu0 0
      %1115 = vmatpush.bf16.msra.mxu0 0
      %1116 = vmatpush.bf16.msra.mxu0 0
      %1117 = vmatpush.bf16.msra.mxu0 0
      %1118 = vmatpush.bf16.msra.mxu0 0
      %1119 = vmatpush.bf16.msra.mxu0 0
      %1120 = vmatpush.bf16.msra.mxu0 %v1082
      %1121 = vmatmul.bf16.gmra.mxu0 %v1073
      %v1122 = vpop.f32.mrf.mxu0
      %v1123 = vadd.f32 0.0, %v1122
      %v1124 = vpop.f32.mrf.mxu0
      %1125 = vdwg.mxu0
      %1126 = vmatpush.bf16.msra.mxu0 0
      %1127 = vmatpush.bf16.msra.mxu0 0
      %1128 = vmatpush.bf16.msra.mxu0 0
      %1129 = vmatpush.bf16.msra.mxu0 0
      %1130 = vmatpush.bf16.msra.mxu0 0
      %1131 = vmatpush.bf16.msra.mxu0 0
      %1132 = vmatpush.bf16.msra.mxu0 0
      %1133 = vmatpush.bf16.msra.mxu0 %v1085
      %1134 = vmatmul.bf16.gmra.mxu0 %v1073
      %v1135 = vpop.f32.mrf.mxu0
      %v1136 = vadd.f32 0.0, %v1135
      %v1137 = vpop.f32.mrf.mxu0
      %1138 = vdwg.mxu0
      %v1139 = vadd.f32 %v1038, %v1097
      %v1140 = vadd.f32 %v1039, %v1110
      %v1141 = vadd.f32 %v1040, %v1123
      %v1142 = vadd.f32 %v1041, %v1136
      %vm1143 = vcmp.gt.f32.partialorder %v1139, 0.0
      %vm1144 = vcmp.gt.f32.partialorder %v1140, 0.0
      %vm1145 = vcmp.gt.f32.partialorder %v1141, 0.0
      %vm1146 = vcmp.gt.f32.partialorder %v1142, 0.0
      %v1147 = vmul.f32 %v1139, 0.1
      %v1148 = vmul.f32 %v1140, 0.1
      %v1149 = vmul.f32 %v1141, 0.1
      %v1150 = vmul.f32 %v1142, 0.1
      %v1151 = vsel %vm1143, %v1139, %v1147
      %v1152 = vsel %vm1144, %v1140, %v1148
      %v1153 = vsel %vm1145, %v1141, %v1149
      %v1154 = vsel %vm1146, %v1142, %v1150
      %v1155 = vld [vmem:[%s249] sm:$0xf]
      %v1157 = vperm.slane %v1155, 0
      %v1158 = vperm.slane %v1155, 1
      %v1159 = vperm.slane %v1155, 2
      %v1160 = vperm.slane %v1155, 3
      %v1165 = vmul.f32 %v1151, %v1157
      %v1166 = vmul.f32 %v1152, %v1158
      %v1167 = vmul.f32 %v1153, %v1159
      %v1168 = vmul.f32 %v1154, %v1160
      %1169 = vst [vmem:[%s254] sm:$0xff] %v1165
      %1170 = vst [vmem:[%s254 + $0x8] sm:$0xff] %v1166
      %1171 = vst [vmem:[%s254 + $0x10] sm:$0xff] %v1167
      %1172 = vst [vmem:[%s254 + $0x18] sm:$0xff] %v1168
      %v1173 = vadd.f32 %v1165, %v1166
      %v1174 = vadd.f32 %v1173, %v1167
      %v1175 = vadd.f32 %v1174, %v1168
      %1176 = vadd.xlane.f32.xlu0 %v1175
      %v1177 = vpop.xlane.xlu0 %1176
      %vm1178 = vcmask 7168
      %1179 = vst.msk [vmem:[%s258] sm:$0xff] %vm1178, %v1177
      %v1180 = vmul.f32 %v1165, %v1165
      %v1181 = vmul.f32 %v1166, %v1166
      %v1182 = vmul.f32 %v1167, %v1167
      %v1183 = vmul.f32 %v1168, %v1168
      %v1184 = vadd.f32 %v1180, %v1181
      %v1185 = vadd.f32 %v1184, %v1182
      %v1186 = vadd.f32 %v1185, %v1183
      %1187 = vadd.xlane.f32.xlu0 %v1186
      %v1188 = vpop.xlane.xlu0 %1187
      %1189 = vst.msk [vmem:[%s262] sm:$0xff] %vm1178, %v1188
      %p1190 = scmp.lt.s32.totalorder %s17, 1
      %s1191 = scalar_select %p1190, %s17, 1
      %s1192 = smul.addr %s1191, 4
      %s1193 = smul.addr %s1192, 8
      %s1194 = scalar_lea.vmem %s3, %s1193
      %p1195 = scmp.lt.s32.totalorder %s17, 1
      %s1196 = scalar_select %p1195, %s17, 1
      %s1197 = smul.addr %s1196, 8
      %s1198 = scalar_lea.vmem %s4, %s1197
      %p1199 = scmp.lt.s32.totalorder %s17, 1
      %s1200 = scalar_select %p1199, %s17, 1
      %s1201 = smul.addr %s1200, 8
      %s1202 = scalar_lea.vmem %s5, %s1201
      // Predicated region
      $region33: #{one_node_forward.2} parent=31 // pred_check
        %p1203 = pneg %p108
      $region34: #{one_node_forward.2} parent=31 // pred_check_branch
        %1205 = sbr.rel (%p1203) target = $region36
      $region35: #{one_node_forward.2} parent=31 // pred_region
        _
      $region36: #{one_node_forward.2} parent=31 // pred_fallthru
        _
      // Predicated region
      $region37: #{one_node_forward.2} parent=31 // pred_check
        %p1206 = pneg %p134
      $region38: #{one_node_forward.2} parent=31 // pred_check_branch
        %1208 = sbr.rel (%p1206) target = $region40
      $region39: #{one_node_forward.2} parent=31 // pred_region
        _
      $region40: #{one_node_forward.2} parent=31 // pred_fallthru
        _
      // Predicated region
      $region41: #{one_node_forward.2} parent=31 // pred_check
        %p1209 = pneg %p160
      $region42: #{one_node_forward.2} parent=31 // pred_check_branch
        %1211 = sbr.rel (%p1209) target = $region44
      $region43: #{one_node_forward.2} parent=31 // pred_region
        _
      $region44: #{one_node_forward.2} parent=31 // pred_fallthru
        _
    $region32: #{one_node_forward.2} parent=5 // pred_fallthru
      _
    %p1212 = scmp.le.s32.totalorder 2, %s12
    // Predicated region
    $region45: #{one_node_forward.2} parent=5 // pred_check
      %p1213 = pneg %p1212
    $region46: #{one_node_forward.2} parent=5 // pred_check_branch
      %1215 = sbr.rel (%p1213) target = $region48
    $region47: #{one_node_forward.2} parent=5 // pred_region
      %s1216 = ssub.s32 %s12, 2
      // Predicated region
      $region49: #{one_node_forward.2} parent=47 // pred_check
        %p1217 = pneg %p114
      $region50: #{one_node_forward.2} parent=47 // pred_check_branch
        %1219 = sbr.rel (%p1217) target = $region52
      $region51: #{one_node_forward.2} parent=47 // pred_region
        %p1220 = scmp.lt.s32.totalorder %s18, 1
        %s1221 = scalar_select %p1220, %s18, 1
        %s1222 = smul.addr %s1221, 4
        %s1223 = smul.addr %s1222, 8
        %s1224 = scalar_lea.vmem %s3, %s1223
      $region52: #{one_node_forward.2} parent=47 // pred_fallthru
        _
      // Predicated region
      $region53: #{one_node_forward.2} parent=47 // pred_check
        %p1225 = pneg %p140
      $region54: #{one_node_forward.2} parent=47 // pred_check_branch
        %1227 = sbr.rel (%p1225) target = $region56
      $region55: #{one_node_forward.2} parent=47 // pred_region
        %p1228 = scmp.lt.s32.totalorder %s18, 1
        %s1229 = scalar_select %p1228, %s18, 1
        %s1230 = smul.addr %s1229, 8
        %s1231 = scalar_lea.vmem %s4, %s1230
      $region56: #{one_node_forward.2} parent=47 // pred_fallthru
        _
      // Predicated region
      $region57: #{one_node_forward.2} parent=47 // pred_check
        %p1232 = pneg %p166
      $region58: #{one_node_forward.2} parent=47 // pred_check_branch
        %1234 = sbr.rel (%p1232) target = $region60
      $region59: #{one_node_forward.2} parent=47 // pred_region
        %p1235 = scmp.lt.s32.totalorder %s18, 1
        %s1236 = scalar_select %p1235, %s18, 1
        %s1237 = smul.addr %s1236, 8
        %s1238 = scalar_lea.vmem %s5, %s1237
      $region60: #{one_node_forward.2} parent=47 // pred_fallthru
        _
    $region48: #{one_node_forward.2} parent=5 // pred_fallthru
      _
  $region6: #{one_node_forward.2} parent=0 // loop_footer
    %s16 = sadd.s32 1, %s12
  $region7: #{one_node_forward.2} parent=0 // loop_footer_branch
    %11 = sbr.rel target = $region3
  $region8: #{one_node_forward.2} parent=0 // loop_exit
    _

</llo_original>
